<compile_context>
chip_gen: v6e
topology: v6e:2x2x1
jax: 0.10.0
libtpu: 0.0.40
codegen_flags: <defaults>
</compile_context>

<pallas_src>
import jax
import jax.numpy as jnp
from jax.experimental import pallas as pl
from jax.experimental.pallas import tpu as pltpu

# ---- configuration (mirrors Seq2SeqAttrs) -----------------------------------
BATCH = 2
NUM_NODES = 16
HIDDEN_DIM = 32            # DCRNN_hidden_dim (= DCGRU num_units)
OUTPUT_DIM = 1             # output_dim
NUM_LAYERS = 2             # DCRNN_num_layers
MAX_DIFFUSION_STEP = 2     # DCRNN_cheb_k
NUM_SUPPORTS = 2           # filter_type == "dual_random_walk"
NUM_MATRICES = NUM_SUPPORTS * MAX_DIFFUSION_STEP + 1


def _vmem():
    return pl.BlockSpec(memory_space=pltpu.MemorySpace.VMEM)


# ---- fused decoder kernel ----------------------------------------------------
def make_decoder_kernel(L, S, K, H, Dout):
    M = S * K + 1
    W_XH = 2 * H            # per-matrix lane width of the [x|h] slab

    def _sigmoid(z):
        # Numerically stable sigmoid; tanh lowers to the EUP slot.
        return 0.5 * (jnp.tanh(0.5 * z) + 1.0)

    def kernel(x_ref, h_ref, sup_ref, *rest):
        layer_refs = rest[:4 * L]
        wp_ref, bp_ref = rest[4 * L], rest[4 * L + 1]
        out_ref, hout_ref = rest[4 * L + 2], rest[4 * L + 3]
        slab_xh, slab_rh = rest[4 * L + 4], rest[4 * L + 5]

        sup = sup_ref[...]                       # (S, BN, BN) bf16, block-diag
        x_cur = x_ref[...]                       # (BN, H) f32 (layer-0 input zero-padded)

        def diffuse_into(slab_ref, z0, width):
            """DCRNN diffusion recursion; writes the M features lane-blockwise.

            x0/x1 deliberately carry over from one support's Chebyshev loop
            into the next support's (the reference does not reset x0 per
            support).  The recursion is column-wise independent, so diffusing
            x / h / r*h jointly or separately is exactly equivalent.
            """
            slab_ref[:, 0:width] = z0
            x0 = z0
            m = 1
            for s in range(S):
                a = sup[s]
                x1 = jnp.dot(a, x0.astype(jnp.bfloat16),
                             preferred_element_type=jnp.float32)
                slab_ref[:, m * width:(m + 1) * width] = x1
                m += 1
                for _ in range(2, K + 1):
                    x2 = 2.0 * jnp.dot(a, x1.astype(jnp.bfloat16),
                                       preferred_element_type=jnp.float32) - x0
                    slab_ref[:, m * width:(m + 1) * width] = x2
                    m += 1
                    x1, x0 = x2, x1

        for l in range(L):
            w1, b1, w2, b2 = (r[...] for r in layer_refs[4 * l:4 * (l + 1)])
            h = h_ref[l]                         # (BN, H) f32

            # ---- single joint diffusion chain over [x | h] -> (BN, M*2H) slab
            diffuse_into(slab_xh, jnp.concatenate([x_cur, h], axis=1), W_XH)

            # ---- fused first gconv: one (BN, M*2H) @ (M*2H, 3H) MXU pass.
            # Columns: [r,u (from x and h) | c-contribution from x only]
            # (h-rows of w1 have zero c-columns).
            gates = jnp.dot(slab_xh[...].astype(jnp.bfloat16), w1,
                            preferred_element_type=jnp.float32) + b1
            ru = _sigmoid(gates[:, :2 * H])
            r = ru[:, :H]
            u = ru[:, H:]
            xc = gates[:, 2 * H:]

            # ---- candidate gconv on r*h (x contribution already in xc)
            diffuse_into(slab_rh, r * h, H)
            c = jnp.tanh(jnp.dot(slab_rh[...].astype(jnp.bfloat16), w2,
                                 preferred_element_type=jnp.float32) + xc + b2)

            h_new = u * h + (1.0 - u) * c
            hout_ref[l] = h_new                  # (BN, H)
            x_cur = h_new

        # ---- fused nn.Linear projection epilogue
        if Dout == 1:
            # Lane-dense (1, BN) store instead of a (BN, 1) masked store.
            out_ref[...] = (jnp.dot(wp_ref[...], x_cur.T,
                                    preferred_element_type=jnp.float32)
                            + bp_ref[...])
        else:
            out_ref[...] = (jnp.dot(x_cur, wp_ref[...],
                                    preferred_element_type=jnp.float32)
                            + bp_ref[...])

    return kernel


# ---- DecoderModel.forward ----------------------------------------------------
def decoder_forward(inputs, hidden_state, params):
    """inputs: (B, N*output_dim); hidden_state: (L, B, N*hidden_dim)."""
    b = inputs.shape[0]
    bn = b * NUM_NODES
    H = HIDDEN_DIM

    x = inputs.reshape(bn, OUTPUT_DIM).astype(jnp.float32)
    # Zero-pad layer-0 input features to H lanes so both layers share one
    # diffusion / gate code path (the matching weight rows are zero).
    x_pad = jnp.concatenate(
        [x, jnp.zeros((bn, H - OUTPUT_DIM), jnp.float32)], axis=1)
    h = hidden_state.reshape(NUM_LAYERS, bn, H).astype(jnp.float32)

    flat = []
    for lp in params["layers"]:
        flat += [lp["w1"], lp["b1"], lp["w2"], lp["b2"]]

    if OUTPUT_DIM == 1:
        wp = params["proj_w"].T                            # (1, H)
        bp = params["proj_b"].reshape(1, 1)
        out_struct = jax.ShapeDtypeStruct((1, bn), jnp.float32)
    else:
        wp = params["proj_w"]                              # (H, OUTPUT_DIM)
        bp = params["proj_b"].reshape(1, OUTPUT_DIM)
        out_struct = jax.ShapeDtypeStruct((bn, OUTPUT_DIM), jnp.float32)

    kernel = make_decoder_kernel(NUM_LAYERS, NUM_SUPPORTS, MAX_DIFFUSION_STEP,
                                 HIDDEN_DIM, OUTPUT_DIM)
    n_in = 3 + len(flat) + 2
    out, h_out = pl.pallas_call(
        kernel,
        out_shape=(out_struct,
                   jax.ShapeDtypeStruct((NUM_LAYERS, bn, H), jnp.float32)),
        in_specs=[_vmem() for _ in range(n_in)],
        out_specs=(_vmem(), _vmem()),
        scratch_shapes=[
            pltpu.VMEM((bn, NUM_MATRICES * 2 * H), jnp.float32),   # [x|h] slab
            pltpu.VMEM((bn, NUM_MATRICES * H), jnp.float32),       # r*h slab
        ],
    )(x_pad, h, params["supports_bd"], *flat, wp, bp)

    output = out.reshape(b, NUM_NODES * OUTPUT_DIM)
    new_hidden = h_out.reshape(NUM_LAYERS, b, NUM_NODES * HIDDEN_DIM)
    return output, new_hidden


# ---- deterministic parameter / support construction --------------------------
def random_walk_matrix(adj):
    d = adj.sum(axis=1)
    d_inv = jnp.where(d > 0, 1.0 / d, 0.0)
    return d_inv[:, None] * adj            # D^{-1} W


def init_params(key):
    H = HIDDEN_DIM
    M = NUM_MATRICES
    keys = jax.random.split(key, 3 + 4 * NUM_LAYERS + 2)

    adj = jax.random.uniform(keys[0], (NUM_NODES, NUM_NODES), jnp.float32)
    # dual_random_walk supports (dense; torch.sparse.mm semantics preserved)
    supports = jnp.stack([random_walk_matrix(adj).T,
                          random_walk_matrix(adj.T).T], axis=0)   # (S, N, N)
    # Fold the batch into the graph: block-diagonal (S, B*N, B*N) supports.
    eye_b = jnp.eye(BATCH, dtype=jnp.float32)
    supports_bd = jnp.stack(
        [jnp.kron(eye_b, supports[s]) for s in range(NUM_SUPPORTS)],
        axis=0).astype(jnp.bfloat16)

    layers = []
    ki = 1
    for layer in range(NUM_LAYERS):
        d_in = OUTPUT_DIM if layer == 0 else H
        fan_in = (d_in + H) * M
        std_ru = (2.0 / (fan_in + 2 * H)) ** 0.5        # xavier-normal-ish
        std_c = (2.0 / (fan_in + H)) ** 0.5

        wx_ru = std_ru * jax.random.normal(keys[ki + 0], (M, d_in, 2 * H), jnp.float32)
        wh_ru = std_ru * jax.random.normal(keys[ki + 1], (M, H, 2 * H), jnp.float32)
        wx_c = std_c * jax.random.normal(keys[ki + 2], (M, d_in, H), jnp.float32)
        wh_c = std_c * jax.random.normal(keys[ki + 3], (M, H, H), jnp.float32)

        # Fused first-gconv weight: rows ordered (matrix, [x-feat(H) | h-feat(H)]),
        # columns [r,u (2H) | c (H)].  Padded x rows and (h-row, c-col) block = 0.
        w1 = jnp.zeros((M, 2 * H, 3 * H), jnp.float32)
        w1 = w1.at[:, :d_in, :2 * H].set(wx_ru)
        w1 = w1.at[:, :d_in, 2 * H:].set(wx_c)
        w1 = w1.at[:, H:, :2 * H].set(wh_ru)
        w1 = w1.reshape(M * 2 * H, 3 * H).astype(jnp.bfloat16)
        b1 = jnp.concatenate(
            [jnp.full((1, 2 * H), 1.0, jnp.float32),     # bias_start=1.0 (r,u)
             jnp.zeros((1, H), jnp.float32)], axis=1)

        w2 = wh_c.reshape(M * H, H).astype(jnp.bfloat16)
        b2 = jnp.zeros((1, H), jnp.float32)              # bias_start=0.0 (c)

        layers.append(dict(w1=w1, b1=b1, w2=w2, b2=b2))
        ki += 4

    proj_std = 1.0 / (H ** 0.5)
    proj_w = proj_std * jax.random.normal(keys[ki], (H, OUTPUT_DIM), jnp.float32)
    proj_b = proj_std * jax.random.normal(keys[ki + 1], (1, OUTPUT_DIM), jnp.float32)
    return dict(supports_bd=supports_bd, layers=layers,
                proj_w=proj_w, proj_b=proj_b)


if __name__ == "__main__":
    key = jax.random.PRNGKey(0)
    kp, kin, kh = jax.random.split(key, 3)
    params = init_params(kp)

    inputs = jax.random.normal(kin, (BATCH, NUM_NODES * OUTPUT_DIM), jnp.float32)
    hidden_state = jax.random.normal(
        kh, (NUM_LAYERS, BATCH, NUM_NODES * HIDDEN_DIM), jnp.float32)

    fwd = jax.jit(decoder_forward)
    output, new_hidden = fwd(inputs, hidden_state, params)
    jax.block_until_ready((output, new_hidden))

    assert output.shape == (BATCH, NUM_NODES * OUTPUT_DIM)
    assert new_hidden.shape == (NUM_LAYERS, BATCH, NUM_NODES * HIDDEN_DIM)
    assert bool(jnp.all(jnp.isfinite(output))) and bool(jnp.all(jnp.isfinite(new_hidden)))
    print("KERNEL_OK")
</pallas_src>

<mosaic_0001>
module attributes {stable_mosaic.version = 11 : i64} {
  func.func @kernel(%arg0: memref<32x32xf32, #tpu.memory_space<vmem>>, %arg1: memref<2x32x32xf32, #tpu.memory_space<vmem>>, %arg2: memref<2x32x32xbf16, #tpu.memory_space<vmem>>, %arg3: memref<320x96xbf16, #tpu.memory_space<vmem>>, %arg4: memref<1x96xf32, #tpu.memory_space<vmem>>, %arg5: memref<160x32xbf16, #tpu.memory_space<vmem>>, %arg6: memref<1x32xf32, #tpu.memory_space<vmem>>, %arg7: memref<320x96xbf16, #tpu.memory_space<vmem>>, %arg8: memref<1x96xf32, #tpu.memory_space<vmem>>, %arg9: memref<160x32xbf16, #tpu.memory_space<vmem>>, %arg10: memref<1x32xf32, #tpu.memory_space<vmem>>, %arg11: memref<1x32xf32, #tpu.memory_space<vmem>>, %arg12: memref<1x1xf32, #tpu.memory_space<vmem>>, %arg13: memref<1x32xf32, #tpu.memory_space<vmem>>, %arg14: memref<2x32x32xf32, #tpu.memory_space<vmem>>, %arg15: memref<32x320xf32, #tpu.memory_space<vmem>>, %arg16: memref<32x160xf32, #tpu.memory_space<vmem>>) attributes {dimension_semantics = [], scalar_prefetch = 0 : i64, scratch_operands = 2 : i64, tpu.core_type = #tpu.core_type<tc>} {
    %c0 = arith.constant 0 : index
    %c0_0 = arith.constant 0 : index
    %c0_1 = arith.constant 0 : index
    %0 = vector.load %arg2[%c0, %c0_0, %c0_1] : memref<2x32x32xbf16, #tpu.memory_space<vmem>>, vector<2x32x32xbf16>
    %c0_2 = arith.constant 0 : index
    %c0_3 = arith.constant 0 : index
    %1 = vector.load %arg0[%c0_2, %c0_3] : memref<32x32xf32, #tpu.memory_space<vmem>>, vector<32x32xf32>
    %c0_4 = arith.constant 0 : index
    %c0_5 = arith.constant 0 : index
    %2 = vector.load %arg3[%c0_4, %c0_5] : memref<320x96xbf16, #tpu.memory_space<vmem>>, vector<320x96xbf16>
    %c0_6 = arith.constant 0 : index
    %c0_7 = arith.constant 0 : index
    %3 = vector.load %arg4[%c0_6, %c0_7] : memref<1x96xf32, #tpu.memory_space<vmem>>, vector<1x96xf32>
    %c0_8 = arith.constant 0 : index
    %c0_9 = arith.constant 0 : index
    %4 = vector.load %arg5[%c0_8, %c0_9] : memref<160x32xbf16, #tpu.memory_space<vmem>>, vector<160x32xbf16>
    %c0_10 = arith.constant 0 : index
    %c0_11 = arith.constant 0 : index
    %5 = vector.load %arg6[%c0_10, %c0_11] : memref<1x32xf32, #tpu.memory_space<vmem>>, vector<1x32xf32>
    %c0_12 = arith.constant 0 : index
    %c0_13 = arith.constant 0 : index
    %c0_14 = arith.constant 0 : index
    %6 = vector.load %arg1[%c0_12, %c0_13, %c0_14] : memref<2x32x32xf32, #tpu.memory_space<vmem>>, vector<1x32x32xf32>
    %7 = vector.shape_cast %6 : vector<1x32x32xf32> to vector<32x32xf32>
    %8 = tpu.concatenate %1, %7 in 1 : vector<32x32xf32>, vector<32x32xf32> -> vector<32x64xf32>
    %c0_15 = arith.constant 0 : index
    %c0_16 = arith.constant 0 : index
    %9 = vector.load %arg15[%c0_15, %c0_16] : memref<32x320xf32, #tpu.memory_space<vmem>>, vector<32x64xf32>
    tpu.vector_store %arg15[%c0_15, %c0_16], %8 {strides = array<i32>} : memref<32x320xf32, #tpu.memory_space<vmem>>, vector<32x64xf32>,
    %10 = vector.extract_strided_slice %0 {offsets = [0, 0, 0], sizes = [1, 32, 32], strides = [1, 1, 1]} : vector<2x32x32xbf16> to vector<1x32x32xbf16>
    %11 = vector.shape_cast %10 : vector<1x32x32xbf16> to vector<32x32xbf16>
    %12 = arith.truncf %8 : vector<32x64xf32> to vector<32x64xbf16>
    %cst = arith.constant dense<0.000000e+00> : vector<32x64xf32>
    %13 = tpu.matmul %11, %12, %cst {dimension_numbers = #tpu.dot_dimension_numbers<[1], [0], [0], [1], [0, 0, 1, 1], [], []>} : vector<32x32xbf16>, vector<32x64xbf16>, vector<32x64xf32> -> vector<32x64xf32>
    %c0_17 = arith.constant 0 : index
    %c64 = arith.constant 64 : index
    %14 = vector.load %arg15[%c0_17, %c64] : memref<32x320xf32, #tpu.memory_space<vmem>>, vector<32x64xf32>
    tpu.vector_store %arg15[%c0_17, %c64], %13 {strides = array<i32>} : memref<32x320xf32, #tpu.memory_space<vmem>>, vector<32x64xf32>,
    %15 = arith.truncf %13 : vector<32x64xf32> to vector<32x64xbf16>
    %cst_18 = arith.constant dense<0.000000e+00> : vector<32x64xf32>
    %16 = tpu.matmul %11, %15, %cst_18 {dimension_numbers = #tpu.dot_dimension_numbers<[1], [0], [0], [1], [0, 0, 1, 1], [], []>} : vector<32x32xbf16>, vector<32x64xbf16>, vector<32x64xf32> -> vector<32x64xf32>
    %cst_19 = arith.constant 2.000000e+00 : f32
    %17 = vector.broadcast %cst_19 : f32 to vector<32x64xf32>
    %18 = arith.mulf %17, %16 : vector<32x64xf32>
    %19 = arith.subf %18, %8 : vector<32x64xf32>
    %c0_20 = arith.constant 0 : index
    %c128 = arith.constant 128 : index
    %20 = vector.load %arg15[%c0_20, %c128] : memref<32x320xf32, #tpu.memory_space<vmem>>, vector<32x64xf32>
    tpu.vector_store %arg15[%c0_20, %c128], %19 {strides = array<i32>} : memref<32x320xf32, #tpu.memory_space<vmem>>, vector<32x64xf32>,
    %21 = vector.extract_strided_slice %0 {offsets = [1, 0, 0], sizes = [1, 32, 32], strides = [1, 1, 1]} : vector<2x32x32xbf16> to vector<1x32x32xbf16>
    %22 = vector.shape_cast %21 : vector<1x32x32xbf16> to vector<32x32xbf16>
    %23 = arith.truncf %13 : vector<32x64xf32> to vector<32x64xbf16>
    %cst_21 = arith.constant dense<0.000000e+00> : vector<32x64xf32>
    %24 = tpu.matmul %22, %23, %cst_21 {dimension_numbers = #tpu.dot_dimension_numbers<[1], [0], [0], [1], [0, 0, 1, 1], [], []>} : vector<32x32xbf16>, vector<32x64xbf16>, vector<32x64xf32> -> vector<32x64xf32>
    %c0_22 = arith.constant 0 : index
    %c192 = arith.constant 192 : index
    %25 = vector.load %arg15[%c0_22, %c192] : memref<32x320xf32, #tpu.memory_space<vmem>>, vector<32x64xf32>
    tpu.vector_store %arg15[%c0_22, %c192], %24 {strides = array<i32>} : memref<32x320xf32, #tpu.memory_space<vmem>>, vector<32x64xf32>,
    %26 = arith.truncf %24 : vector<32x64xf32> to vector<32x64xbf16>
    %cst_23 = arith.constant dense<0.000000e+00> : vector<32x64xf32>
    %27 = tpu.matmul %22, %26, %cst_23 {dimension_numbers = #tpu.dot_dimension_numbers<[1], [0], [0], [1], [0, 0, 1, 1], [], []>} : vector<32x32xbf16>, vector<32x64xbf16>, vector<32x64xf32> -> vector<32x64xf32>
    %cst_24 = arith.constant 2.000000e+00 : f32
    %28 = vector.broadcast %cst_24 : f32 to vector<32x64xf32>
    %29 = arith.mulf %28, %27 : vector<32x64xf32>
    %30 = arith.subf %29, %13 : vector<32x64xf32>
    %c0_25 = arith.constant 0 : index
    %c256 = arith.constant 256 : index
    %31 = vector.load %arg15[%c0_25, %c256] : memref<32x320xf32, #tpu.memory_space<vmem>>, vector<32x64xf32>
    tpu.vector_store %arg15[%c0_25, %c256], %30 {strides = array<i32>} : memref<32x320xf32, #tpu.memory_space<vmem>>, vector<32x64xf32>,
    %c0_26 = arith.constant 0 : index
    %c0_27 = arith.constant 0 : index
    %32 = vector.load %arg15[%c0_26, %c0_27] : memref<32x320xf32, #tpu.memory_space<vmem>>, vector<32x320xf32>
    %33 = arith.truncf %32 : vector<32x320xf32> to vector<32x320xbf16>
    %cst_28 = arith.constant dense<0.000000e+00> : vector<32x96xf32>
    %34 = tpu.matmul %33, %2, %cst_28 {dimension_numbers = #tpu.dot_dimension_numbers<[1], [0], [0], [1], [0, 0, 1, 1], [], []>} : vector<32x320xbf16>, vector<320x96xbf16>, vector<32x96xf32> -> vector<32x96xf32>
    %35 = vector.broadcast %3 : vector<1x96xf32> to vector<32x96xf32>
    %36 = arith.addf %34, %35 : vector<32x96xf32>
    %37 = vector.extract_strided_slice %36 {offsets = [0, 0], sizes = [32, 64], strides = [1, 1]} : vector<32x96xf32> to vector<32x64xf32>
    %cst_29 = arith.constant 5.000000e-01 : f32
    %38 = vector.broadcast %cst_29 : f32 to vector<32x64xf32>
    %39 = arith.mulf %38, %37 : vector<32x64xf32>
    %40 = math.tanh %39 : vector<32x64xf32>
    %cst_30 = arith.constant 1.000000e+00 : f32
    %41 = vector.broadcast %cst_30 : f32 to vector<32x64xf32>
    %42 = arith.addf %40, %41 : vector<32x64xf32>
    %cst_31 = arith.constant 5.000000e-01 : f32
    %43 = vector.broadcast %cst_31 : f32 to vector<32x64xf32>
    %44 = arith.mulf %43, %42 : vector<32x64xf32>
    %45 = vector.extract_strided_slice %44 {offsets = [0, 0], sizes = [32, 32], strides = [1, 1]} : vector<32x64xf32> to vector<32x32xf32>
    %46 = vector.extract_strided_slice %44 {offsets = [0, 32], sizes = [32, 32], strides = [1, 1]} : vector<32x64xf32> to vector<32x32xf32>
    %47 = vector.extract_strided_slice %36 {offsets = [0, 64], sizes = [32, 32], strides = [1, 1]} : vector<32x96xf32> to vector<32x32xf32>
    %48 = arith.mulf %45, %7 : vector<32x32xf32>
    %c0_32 = arith.constant 0 : index
    %c0_33 = arith.constant 0 : index
    %49 = vector.load %arg16[%c0_32, %c0_33] : memref<32x160xf32, #tpu.memory_space<vmem>>, vector<32x32xf32>
    tpu.vector_store %arg16[%c0_32, %c0_33], %48 {strides = array<i32>} : memref<32x160xf32, #tpu.memory_space<vmem>>, vector<32x32xf32>,
    %50 = vector.extract_strided_slice %0 {offsets = [0, 0, 0], sizes = [1, 32, 32], strides = [1, 1, 1]} : vector<2x32x32xbf16> to vector<1x32x32xbf16>
    %51 = vector.shape_cast %50 : vector<1x32x32xbf16> to vector<32x32xbf16>
    %52 = arith.truncf %48 : vector<32x32xf32> to vector<32x32xbf16>
    %cst_34 = arith.constant dense<0.000000e+00> : vector<32x32xf32>
    %53 = tpu.matmul %51, %52, %cst_34 {dimension_numbers = #tpu.dot_dimension_numbers<[1], [0], [0], [1], [0, 0, 1, 1], [], []>} : vector<32x32xbf16>, vector<32x32xbf16>, vector<32x32xf32> -> vector<32x32xf32>
    %c0_35 = arith.constant 0 : index
    %c32 = arith.constant 32 : index
    %54 = vector.load %arg16[%c0_35, %c32] : memref<32x160xf32, #tpu.memory_space<vmem>>, vector<32x32xf32>
    tpu.vector_store %arg16[%c0_35, %c32], %53 {strides = array<i32>} : memref<32x160xf32, #tpu.memory_space<vmem>>, vector<32x32xf32>,
    %55 = arith.truncf %53 : vector<32x32xf32> to vector<32x32xbf16>
    %cst_36 = arith.constant dense<0.000000e+00> : vector<32x32xf32>
    %56 = tpu.matmul %51, %55, %cst_36 {dimension_numbers = #tpu.dot_dimension_numbers<[1], [0], [0], [1], [0, 0, 1, 1], [], []>} : vector<32x32xbf16>, vector<32x32xbf16>, vector<32x32xf32> -> vector<32x32xf32>
    %cst_37 = arith.constant 2.000000e+00 : f32
    %57 = vector.broadcast %cst_37 : f32 to vector<32x32xf32>
    %58 = arith.mulf %57, %56 : vector<32x32xf32>
    %59 = arith.subf %58, %48 : vector<32x32xf32>
    %c0_38 = arith.constant 0 : index
    %c64_39 = arith.constant 64 : index
    %60 = vector.load %arg16[%c0_38, %c64_39] : memref<32x160xf32, #tpu.memory_space<vmem>>, vector<32x32xf32>
    tpu.vector_store %arg16[%c0_38, %c64_39], %59 {strides = array<i32>} : memref<32x160xf32, #tpu.memory_space<vmem>>, vector<32x32xf32>,
    %61 = vector.extract_strided_slice %0 {offsets = [1, 0, 0], sizes = [1, 32, 32], strides = [1, 1, 1]} : vector<2x32x32xbf16> to vector<1x32x32xbf16>
    %62 = vector.shape_cast %61 : vector<1x32x32xbf16> to vector<32x32xbf16>
    %63 = arith.truncf %53 : vector<32x32xf32> to vector<32x32xbf16>
    %cst_40 = arith.constant dense<0.000000e+00> : vector<32x32xf32>
    %64 = tpu.matmul %62, %63, %cst_40 {dimension_numbers = #tpu.dot_dimension_numbers<[1], [0], [0], [1], [0, 0, 1, 1], [], []>} : vector<32x32xbf16>, vector<32x32xbf16>, vector<32x32xf32> -> vector<32x32xf32>
    %c0_41 = arith.constant 0 : index
    %c96 = arith.constant 96 : index
    %65 = vector.load %arg16[%c0_41, %c96] : memref<32x160xf32, #tpu.memory_space<vmem>>, vector<32x32xf32>
    tpu.vector_store %arg16[%c0_41, %c96], %64 {strides = array<i32>} : memref<32x160xf32, #tpu.memory_space<vmem>>, vector<32x32xf32>,
    %66 = arith.truncf %64 : vector<32x32xf32> to vector<32x32xbf16>
    %cst_42 = arith.constant dense<0.000000e+00> : vector<32x32xf32>
    %67 = tpu.matmul %62, %66, %cst_42 {dimension_numbers = #tpu.dot_dimension_numbers<[1], [0], [0], [1], [0, 0, 1, 1], [], []>} : vector<32x32xbf16>, vector<32x32xbf16>, vector<32x32xf32> -> vector<32x32xf32>
    %cst_43 = arith.constant 2.000000e+00 : f32
    %68 = vector.broadcast %cst_43 : f32 to vector<32x32xf32>
    %69 = arith.mulf %68, %67 : vector<32x32xf32>
    %70 = arith.subf %69, %53 : vector<32x32xf32>
    %c0_44 = arith.constant 0 : index
    %c128_45 = arith.constant 128 : index
    %71 = vector.load %arg16[%c0_44, %c128_45] : memref<32x160xf32, #tpu.memory_space<vmem>>, vector<32x32xf32>
    tpu.vector_store %arg16[%c0_44, %c128_45], %70 {strides = array<i32>} : memref<32x160xf32, #tpu.memory_space<vmem>>, vector<32x32xf32>,
    %c0_46 = arith.constant 0 : index
    %c0_47 = arith.constant 0 : index
    %72 = vector.load %arg16[%c0_46, %c0_47] : memref<32x160xf32, #tpu.memory_space<vmem>>, vector<32x160xf32>
    %73 = arith.truncf %72 : vector<32x160xf32> to vector<32x160xbf16>
    %cst_48 = arith.constant dense<0.000000e+00> : vector<32x32xf32>
    %74 = tpu.matmul %73, %4, %cst_48 {dimension_numbers = #tpu.dot_dimension_numbers<[1], [0], [0], [1], [0, 0, 1, 1], [], []>} : vector<32x160xbf16>, vector<160x32xbf16>, vector<32x32xf32> -> vector<32x32xf32>
    %75 = arith.addf %74, %47 : vector<32x32xf32>
    %76 = vector.broadcast %5 : vector<1x32xf32> to vector<32x32xf32>
    %77 = arith.addf %75, %76 : vector<32x32xf32>
    %78 = math.tanh %77 : vector<32x32xf32>
    %79 = arith.mulf %46, %7 : vector<32x32xf32>
    %cst_49 = arith.constant 1.000000e+00 : f32
    %80 = vector.broadcast %cst_49 : f32 to vector<32x32xf32>
    %81 = arith.subf %80, %46 : vector<32x32xf32>
    %82 = arith.mulf %81, %78 : vector<32x32xf32>
    %83 = arith.addf %79, %82 : vector<32x32xf32>
    %c0_50 = arith.constant 0 : index
    %c0_51 = arith.constant 0 : index
    %c0_52 = arith.constant 0 : index
    %84 = vector.load %arg14[%c0_50, %c0_51, %c0_52] : memref<2x32x32xf32, #tpu.memory_space<vmem>>, vector<1x32x32xf32>
    %85 = vector.shape_cast %84 : vector<1x32x32xf32> to vector<32x32xf32>
    %86 = vector.shape_cast %83 : vector<32x32xf32> to vector<1x32x32xf32>
    tpu.vector_store %arg14[%c0_50, %c0_51, %c0_52], %86 {strides = array<i32>} : memref<2x32x32xf32, #tpu.memory_space<vmem>>, vector<1x32x32xf32>,
    %c0_53 = arith.constant 0 : index
    %c0_54 = arith.constant 0 : index
    %87 = vector.load %arg7[%c0_53, %c0_54] : memref<320x96xbf16, #tpu.memory_space<vmem>>, vector<320x96xbf16>
    %c0_55 = arith.constant 0 : index
    %c0_56 = arith.constant 0 : index
    %88 = vector.load %arg8[%c0_55, %c0_56] : memref<1x96xf32, #tpu.memory_space<vmem>>, vector<1x96xf32>
    %c0_57 = arith.constant 0 : index
    %c0_58 = arith.constant 0 : index
    %89 = vector.load %arg9[%c0_57, %c0_58] : memref<160x32xbf16, #tpu.memory_space<vmem>>, vector<160x32xbf16>
    %c0_59 = arith.constant 0 : index
    %c0_60 = arith.constant 0 : index
    %90 = vector.load %arg10[%c0_59, %c0_60] : memref<1x32xf32, #tpu.memory_space<vmem>>, vector<1x32xf32>
    %c1 = arith.constant 1 : index
    %c0_61 = arith.constant 0 : index
    %c0_62 = arith.constant 0 : index
    %91 = vector.load %arg1[%c1, %c0_61, %c0_62] : memref<2x32x32xf32, #tpu.memory_space<vmem>>, vector<1x32x32xf32>
    %92 = vector.shape_cast %91 : vector<1x32x32xf32> to vector<32x32xf32>
    %93 = tpu.concatenate %83, %92 in 1 : vector<32x32xf32>, vector<32x32xf32> -> vector<32x64xf32>
    %c0_63 = arith.constant 0 : index
    %c0_64 = arith.constant 0 : index
    %94 = vector.load %arg15[%c0_63, %c0_64] : memref<32x320xf32, #tpu.memory_space<vmem>>, vector<32x64xf32>
    tpu.vector_store %arg15[%c0_63, %c0_64], %93 {strides = array<i32>} : memref<32x320xf32, #tpu.memory_space<vmem>>, vector<32x64xf32>,
    %95 = vector.extract_strided_slice %0 {offsets = [0, 0, 0], sizes = [1, 32, 32], strides = [1, 1, 1]} : vector<2x32x32xbf16> to vector<1x32x32xbf16>
    %96 = vector.shape_cast %95 : vector<1x32x32xbf16> to vector<32x32xbf16>
    %97 = arith.truncf %93 : vector<32x64xf32> to vector<32x64xbf16>
    %cst_65 = arith.constant dense<0.000000e+00> : vector<32x64xf32>
    %98 = tpu.matmul %96, %97, %cst_65 {dimension_numbers = #tpu.dot_dimension_numbers<[1], [0], [0], [1], [0, 0, 1, 1], [], []>} : vector<32x32xbf16>, vector<32x64xbf16>, vector<32x64xf32> -> vector<32x64xf32>
    %c0_66 = arith.constant 0 : index
    %c64_67 = arith.constant 64 : index
    %99 = vector.load %arg15[%c0_66, %c64_67] : memref<32x320xf32, #tpu.memory_space<vmem>>, vector<32x64xf32>
    tpu.vector_store %arg15[%c0_66, %c64_67], %98 {strides = array<i32>} : memref<32x320xf32, #tpu.memory_space<vmem>>, vector<32x64xf32>,
    %100 = arith.truncf %98 : vector<32x64xf32> to vector<32x64xbf16>
    %cst_68 = arith.constant dense<0.000000e+00> : vector<32x64xf32>
    %101 = tpu.matmul %96, %100, %cst_68 {dimension_numbers = #tpu.dot_dimension_numbers<[1], [0], [0], [1], [0, 0, 1, 1], [], []>} : vector<32x32xbf16>, vector<32x64xbf16>, vector<32x64xf32> -> vector<32x64xf32>
    %cst_69 = arith.constant 2.000000e+00 : f32
    %102 = vector.broadcast %cst_69 : f32 to vector<32x64xf32>
    %103 = arith.mulf %102, %101 : vector<32x64xf32>
    %104 = arith.subf %103, %93 : vector<32x64xf32>
    %c0_70 = arith.constant 0 : index
    %c128_71 = arith.constant 128 : index
    %105 = vector.load %arg15[%c0_70, %c128_71] : memref<32x320xf32, #tpu.memory_space<vmem>>, vector<32x64xf32>
    tpu.vector_store %arg15[%c0_70, %c128_71], %104 {strides = array<i32>} : memref<32x320xf32, #tpu.memory_space<vmem>>, vector<32x64xf32>,
    %106 = vector.extract_strided_slice %0 {offsets = [1, 0, 0], sizes = [1, 32, 32], strides = [1, 1, 1]} : vector<2x32x32xbf16> to vector<1x32x32xbf16>
    %107 = vector.shape_cast %106 : vector<1x32x32xbf16> to vector<32x32xbf16>
    %108 = arith.truncf %98 : vector<32x64xf32> to vector<32x64xbf16>
    %cst_72 = arith.constant dense<0.000000e+00> : vector<32x64xf32>
    %109 = tpu.matmul %107, %108, %cst_72 {dimension_numbers = #tpu.dot_dimension_numbers<[1], [0], [0], [1], [0, 0, 1, 1], [], []>} : vector<32x32xbf16>, vector<32x64xbf16>, vector<32x64xf32> -> vector<32x64xf32>
    %c0_73 = arith.constant 0 : index
    %c192_74 = arith.constant 192 : index
    %110 = vector.load %arg15[%c0_73, %c192_74] : memref<32x320xf32, #tpu.memory_space<vmem>>, vector<32x64xf32>
    tpu.vector_store %arg15[%c0_73, %c192_74], %109 {strides = array<i32>} : memref<32x320xf32, #tpu.memory_space<vmem>>, vector<32x64xf32>,
    %111 = arith.truncf %109 : vector<32x64xf32> to vector<32x64xbf16>
    %cst_75 = arith.constant dense<0.000000e+00> : vector<32x64xf32>
    %112 = tpu.matmul %107, %111, %cst_75 {dimension_numbers = #tpu.dot_dimension_numbers<[1], [0], [0], [1], [0, 0, 1, 1], [], []>} : vector<32x32xbf16>, vector<32x64xbf16>, vector<32x64xf32> -> vector<32x64xf32>
    %cst_76 = arith.constant 2.000000e+00 : f32
    %113 = vector.broadcast %cst_76 : f32 to vector<32x64xf32>
    %114 = arith.mulf %113, %112 : vector<32x64xf32>
    %115 = arith.subf %114, %98 : vector<32x64xf32>
    %c0_77 = arith.constant 0 : index
    %c256_78 = arith.constant 256 : index
    %116 = vector.load %arg15[%c0_77, %c256_78] : memref<32x320xf32, #tpu.memory_space<vmem>>, vector<32x64xf32>
    tpu.vector_store %arg15[%c0_77, %c256_78], %115 {strides = array<i32>} : memref<32x320xf32, #tpu.memory_space<vmem>>, vector<32x64xf32>,
    %c0_79 = arith.constant 0 : index
    %c0_80 = arith.constant 0 : index
    %117 = vector.load %arg15[%c0_79, %c0_80] : memref<32x320xf32, #tpu.memory_space<vmem>>, vector<32x320xf32>
    %118 = arith.truncf %117 : vector<32x320xf32> to vector<32x320xbf16>
    %cst_81 = arith.constant dense<0.000000e+00> : vector<32x96xf32>
    %119 = tpu.matmul %118, %87, %cst_81 {dimension_numbers = #tpu.dot_dimension_numbers<[1], [0], [0], [1], [0, 0, 1, 1], [], []>} : vector<32x320xbf16>, vector<320x96xbf16>, vector<32x96xf32> -> vector<32x96xf32>
    %120 = vector.broadcast %88 : vector<1x96xf32> to vector<32x96xf32>
    %121 = arith.addf %119, %120 : vector<32x96xf32>
    %122 = vector.extract_strided_slice %121 {offsets = [0, 0], sizes = [32, 64], strides = [1, 1]} : vector<32x96xf32> to vector<32x64xf32>
    %cst_82 = arith.constant 5.000000e-01 : f32
    %123 = vector.broadcast %cst_82 : f32 to vector<32x64xf32>
    %124 = arith.mulf %123, %122 : vector<32x64xf32>
    %125 = math.tanh %124 : vector<32x64xf32>
    %cst_83 = arith.constant 1.000000e+00 : f32
    %126 = vector.broadcast %cst_83 : f32 to vector<32x64xf32>
    %127 = arith.addf %125, %126 : vector<32x64xf32>
    %cst_84 = arith.constant 5.000000e-01 : f32
    %128 = vector.broadcast %cst_84 : f32 to vector<32x64xf32>
    %129 = arith.mulf %128, %127 : vector<32x64xf32>
    %130 = vector.extract_strided_slice %129 {offsets = [0, 0], sizes = [32, 32], strides = [1, 1]} : vector<32x64xf32> to vector<32x32xf32>
    %131 = vector.extract_strided_slice %129 {offsets = [0, 32], sizes = [32, 32], strides = [1, 1]} : vector<32x64xf32> to vector<32x32xf32>
    %132 = vector.extract_strided_slice %121 {offsets = [0, 64], sizes = [32, 32], strides = [1, 1]} : vector<32x96xf32> to vector<32x32xf32>
    %133 = arith.mulf %130, %92 : vector<32x32xf32>
    %c0_85 = arith.constant 0 : index
    %c0_86 = arith.constant 0 : index
    %134 = vector.load %arg16[%c0_85, %c0_86] : memref<32x160xf32, #tpu.memory_space<vmem>>, vector<32x32xf32>
    tpu.vector_store %arg16[%c0_85, %c0_86], %133 {strides = array<i32>} : memref<32x160xf32, #tpu.memory_space<vmem>>, vector<32x32xf32>,
    %135 = vector.extract_strided_slice %0 {offsets = [0, 0, 0], sizes = [1, 32, 32], strides = [1, 1, 1]} : vector<2x32x32xbf16> to vector<1x32x32xbf16>
    %136 = vector.shape_cast %135 : vector<1x32x32xbf16> to vector<32x32xbf16>
    %137 = arith.truncf %133 : vector<32x32xf32> to vector<32x32xbf16>
    %cst_87 = arith.constant dense<0.000000e+00> : vector<32x32xf32>
    %138 = tpu.matmul %136, %137, %cst_87 {dimension_numbers = #tpu.dot_dimension_numbers<[1], [0], [0], [1], [0, 0, 1, 1], [], []>} : vector<32x32xbf16>, vector<32x32xbf16>, vector<32x32xf32> -> vector<32x32xf32>
    %c0_88 = arith.constant 0 : index
    %c32_89 = arith.constant 32 : index
    %139 = vector.load %arg16[%c0_88, %c32_89] : memref<32x160xf32, #tpu.memory_space<vmem>>, vector<32x32xf32>
    tpu.vector_store %arg16[%c0_88, %c32_89], %138 {strides = array<i32>} : memref<32x160xf32, #tpu.memory_space<vmem>>, vector<32x32xf32>,
    %140 = arith.truncf %138 : vector<32x32xf32> to vector<32x32xbf16>
    %cst_90 = arith.constant dense<0.000000e+00> : vector<32x32xf32>
    %141 = tpu.matmul %136, %140, %cst_90 {dimension_numbers = #tpu.dot_dimension_numbers<[1], [0], [0], [1], [0, 0, 1, 1], [], []>} : vector<32x32xbf16>, vector<32x32xbf16>, vector<32x32xf32> -> vector<32x32xf32>
    %cst_91 = arith.constant 2.000000e+00 : f32
    %142 = vector.broadcast %cst_91 : f32 to vector<32x32xf32>
    %143 = arith.mulf %142, %141 : vector<32x32xf32>
    %144 = arith.subf %143, %133 : vector<32x32xf32>
    %c0_92 = arith.constant 0 : index
    %c64_93 = arith.constant 64 : index
    %145 = vector.load %arg16[%c0_92, %c64_93] : memref<32x160xf32, #tpu.memory_space<vmem>>, vector<32x32xf32>
    tpu.vector_store %arg16[%c0_92, %c64_93], %144 {strides = array<i32>} : memref<32x160xf32, #tpu.memory_space<vmem>>, vector<32x32xf32>,
    %146 = vector.extract_strided_slice %0 {offsets = [1, 0, 0], sizes = [1, 32, 32], strides = [1, 1, 1]} : vector<2x32x32xbf16> to vector<1x32x32xbf16>
    %147 = vector.shape_cast %146 : vector<1x32x32xbf16> to vector<32x32xbf16>
    %148 = arith.truncf %138 : vector<32x32xf32> to vector<32x32xbf16>
    %cst_94 = arith.constant dense<0.000000e+00> : vector<32x32xf32>
    %149 = tpu.matmul %147, %148, %cst_94 {dimension_numbers = #tpu.dot_dimension_numbers<[1], [0], [0], [1], [0, 0, 1, 1], [], []>} : vector<32x32xbf16>, vector<32x32xbf16>, vector<32x32xf32> -> vector<32x32xf32>
    %c0_95 = arith.constant 0 : index
    %c96_96 = arith.constant 96 : index
    %150 = vector.load %arg16[%c0_95, %c96_96] : memref<32x160xf32, #tpu.memory_space<vmem>>, vector<32x32xf32>
    tpu.vector_store %arg16[%c0_95, %c96_96], %149 {strides = array<i32>} : memref<32x160xf32, #tpu.memory_space<vmem>>, vector<32x32xf32>,
    %151 = arith.truncf %149 : vector<32x32xf32> to vector<32x32xbf16>
    %cst_97 = arith.constant dense<0.000000e+00> : vector<32x32xf32>
    %152 = tpu.matmul %147, %151, %cst_97 {dimension_numbers = #tpu.dot_dimension_numbers<[1], [0], [0], [1], [0, 0, 1, 1], [], []>} : vector<32x32xbf16>, vector<32x32xbf16>, vector<32x32xf32> -> vector<32x32xf32>
    %cst_98 = arith.constant 2.000000e+00 : f32
    %153 = vector.broadcast %cst_98 : f32 to vector<32x32xf32>
    %154 = arith.mulf %153, %152 : vector<32x32xf32>
    %155 = arith.subf %154, %138 : vector<32x32xf32>
    %c0_99 = arith.constant 0 : index
    %c128_100 = arith.constant 128 : index
    %156 = vector.load %arg16[%c0_99, %c128_100] : memref<32x160xf32, #tpu.memory_space<vmem>>, vector<32x32xf32>
    tpu.vector_store %arg16[%c0_99, %c128_100], %155 {strides = array<i32>} : memref<32x160xf32, #tpu.memory_space<vmem>>, vector<32x32xf32>,
    %c0_101 = arith.constant 0 : index
    %c0_102 = arith.constant 0 : index
    %157 = vector.load %arg16[%c0_101, %c0_102] : memref<32x160xf32, #tpu.memory_space<vmem>>, vector<32x160xf32>
    %158 = arith.truncf %157 : vector<32x160xf32> to vector<32x160xbf16>
    %cst_103 = arith.constant dense<0.000000e+00> : vector<32x32xf32>
    %159 = tpu.matmul %158, %89, %cst_103 {dimension_numbers = #tpu.dot_dimension_numbers<[1], [0], [0], [1], [0, 0, 1, 1], [], []>} : vector<32x160xbf16>, vector<160x32xbf16>, vector<32x32xf32> -> vector<32x32xf32>
    %160 = arith.addf %159, %132 : vector<32x32xf32>
    %161 = vector.broadcast %90 : vector<1x32xf32> to vector<32x32xf32>
    %162 = arith.addf %160, %161 : vector<32x32xf32>
    %163 = math.tanh %162 : vector<32x32xf32>
    %164 = arith.mulf %131, %92 : vector<32x32xf32>
    %cst_104 = arith.constant 1.000000e+00 : f32
    %165 = vector.broadcast %cst_104 : f32 to vector<32x32xf32>
    %166 = arith.subf %165, %131 : vector<32x32xf32>
    %167 = arith.mulf %166, %163 : vector<32x32xf32>
    %168 = arith.addf %164, %167 : vector<32x32xf32>
    %c1_105 = arith.constant 1 : index
    %c0_106 = arith.constant 0 : index
    %c0_107 = arith.constant 0 : index
    %169 = vector.load %arg14[%c1_105, %c0_106, %c0_107] : memref<2x32x32xf32, #tpu.memory_space<vmem>>, vector<1x32x32xf32>
    %170 = vector.shape_cast %169 : vector<1x32x32xf32> to vector<32x32xf32>
    %171 = vector.shape_cast %168 : vector<32x32xf32> to vector<1x32x32xf32>
    tpu.vector_store %arg14[%c1_105, %c0_106, %c0_107], %171 {strides = array<i32>} : memref<2x32x32xf32, #tpu.memory_space<vmem>>, vector<1x32x32xf32>,
    %c0_108 = arith.constant 0 : index
    %c0_109 = arith.constant 0 : index
    %172 = vector.load %arg11[%c0_108, %c0_109] : memref<1x32xf32, #tpu.memory_space<vmem>>, vector<1x32xf32>
    %173 = tpu.transpose %168, [1, 0] : vector<32x32xf32> -> vector<32x32xf32>
    %cst_110 = arith.constant dense<0.000000e+00> : vector<1x32xf32>
    %174 = tpu.matmul %172, %173, %cst_110 {dimension_numbers = #tpu.dot_dimension_numbers<[1], [0], [0], [1], [0, 0, 1, 1], [], []>} : vector<1x32xf32>, vector<32x32xf32>, vector<1x32xf32> -> vector<1x32xf32>
    %c0_111 = arith.constant 0 : index
    %c0_112 = arith.constant 0 : index
    %175 = vector.load %arg12[%c0_111, %c0_112] : memref<1x1xf32, #tpu.memory_space<vmem>>, vector<1x1xf32>
    %176 = vector.broadcast %175 : vector<1x1xf32> to vector<1x32xf32>
    %177 = arith.addf %174, %176 : vector<1x32xf32>
    %c0_113 = arith.constant 0 : index
    %c0_114 = arith.constant 0 : index
    %178 = vector.load %arg13[%c0_113, %c0_114] : memref<1x32xf32, #tpu.memory_space<vmem>>, vector<1x32xf32>
    tpu.vector_store %arg13[%c0_113, %c0_114], %177 {strides = array<i32>} : memref<1x32xf32, #tpu.memory_space<vmem>>, vector<1x32xf32>,
    return
  }
}

</mosaic_0001>

<llo_original>
// kernel: decoder_forward.1
$region0: #{decoder_forward.1}
  #allocation0 [shape = 'u32[]', space=smem, size = 0x4, offset = 0x4, fixed_abs, tag = 'smem constant byte address 0x4 - core index']
  #allocation1 [shape = 'u32[144,128]{1,0:T(1,128)}', space=vmem, size = 0x12000, scoped, tag = 'internal scratch']
  #allocation2 [shape = 'f32[32,320]{1,0:T(8,128)}', space=vmem, size = 0xc000, scoped, tag = 'scratch operand']
  #allocation3 [shape = 'f32[32,160]{1,0:T(8,128)}', space=vmem, size = 0x8000, scoped, tag = 'scratch operand']
  #allocation4 [shape = 'f32[1,1]{1,0:T(1,128)S(1)}', space=vmem, size = 0x200, scoped, tag = 'scoped memory for decoder_forward.1']
  %s0 = inlined_call_operand.vmem [shape: f32[32,32], index: 0, kind: input, shape index: {}]
  %s1 = inlined_call_operand.vmem [shape: f32[2,32,32], index: 1, kind: input, shape index: {}]
  %s2 = inlined_call_operand.vmem [shape: bf16[2,32,32], index: 2, kind: input, shape index: {}]
  %s3 = inlined_call_operand.vmem [shape: bf16[320,96], index: 3, kind: input, shape index: {}]
  %s4 = inlined_call_operand.vmem [shape: f32[1,96], index: 4, kind: input, shape index: {}]
  %s5 = inlined_call_operand.vmem [shape: bf16[160,32], index: 5, kind: input, shape index: {}]
  %s6 = inlined_call_operand.vmem [shape: f32[1,32], index: 6, kind: input, shape index: {}]
  %s7 = inlined_call_operand.vmem [shape: bf16[320,96], index: 7, kind: input, shape index: {}]
  %s8 = inlined_call_operand.vmem [shape: f32[1,96], index: 8, kind: input, shape index: {}]
  %s9 = inlined_call_operand.vmem [shape: bf16[160,32], index: 9, kind: input, shape index: {}]
  %s10 = inlined_call_operand.vmem [shape: f32[1,32], index: 10, kind: input, shape index: {}]
  %s11 = inlined_call_operand.vmem [shape: f32[1,32], index: 11, kind: input, shape index: {}]
  %s12 = inlined_call_operand.<no memory space> [shape: f32[1,1], index: 12, kind: input, shape index: {}]
  %s13 = inlined_call_operand.vmem [shape: f32[1,32], index: 13, kind: output, shape index: {0}]
  %s14 = inlined_call_operand.vmem [shape: f32[2,32,32], index: 14, kind: output, shape index: {1}]
  %15 = xla_tuple %s13, %s14
  %s16 = sld [smem:[#allocation0]]
  $region70: #{decoder_forward.1} parent=0
    _
  %s18 = ssub.s32 1, %s16
  %s19 = scalar_select 0, %s18, %s16
  %v20 = vstv %s12
  %21 = vst [vmem:[#allocation4] sm:$0x1] %v20
  // Predicated region
  $region2: #{decoder_forward.1} parent=0 // pred_check
    _
  $region3: #{decoder_forward.1} parent=0 // pred_check_branch
    %23 = sbr.rel (0) target = $region5
  $region4: #{decoder_forward.1} parent=0 // pred_region
    _
  $region5: #{decoder_forward.1} parent=0 // pred_fallthru
    _
  // Predicated region
  $region6: #{decoder_forward.1} parent=0 // pred_check
    _
  $region7: #{decoder_forward.1} parent=0 // pred_check_branch
    %25 = sbr.rel (0) target = $region9
  $region8: #{decoder_forward.1} parent=0 // pred_region
    _
  $region9: #{decoder_forward.1} parent=0 // pred_fallthru
    _
  // Predicated region
  $region10: #{decoder_forward.1} parent=0 // pred_check
    _
  $region11: #{decoder_forward.1} parent=0 // pred_check_branch
    %27 = sbr.rel (0) target = $region13
  $region12: #{decoder_forward.1} parent=0 // pred_region
    _
  $region13: #{decoder_forward.1} parent=0 // pred_fallthru
    _
  // Predicated region
  $region14: #{decoder_forward.1} parent=0 // pred_check
    _
  $region15: #{decoder_forward.1} parent=0 // pred_check_branch
    %29 = sbr.rel (0) target = $region17
  $region16: #{decoder_forward.1} parent=0 // pred_region
    _
  $region17: #{decoder_forward.1} parent=0 // pred_fallthru
    _
  // Predicated region
  $region18: #{decoder_forward.1} parent=0 // pred_check
    _
  $region19: #{decoder_forward.1} parent=0 // pred_check_branch
    %31 = sbr.rel (0) target = $region21
  $region20: #{decoder_forward.1} parent=0 // pred_region
    _
  $region21: #{decoder_forward.1} parent=0 // pred_fallthru
    _
  // Predicated region
  $region22: #{decoder_forward.1} parent=0 // pred_check
    _
  $region23: #{decoder_forward.1} parent=0 // pred_check_branch
    %33 = sbr.rel (0) target = $region25
  $region24: #{decoder_forward.1} parent=0 // pred_region
    _
  $region25: #{decoder_forward.1} parent=0 // pred_fallthru
    _
  // Predicated region
  $region26: #{decoder_forward.1} parent=0 // pred_check
    _
  $region27: #{decoder_forward.1} parent=0 // pred_check_branch
    %35 = sbr.rel (0) target = $region29
  $region28: #{decoder_forward.1} parent=0 // pred_region
    _
  $region29: #{decoder_forward.1} parent=0 // pred_fallthru
    _
  // Predicated region
  $region30: #{decoder_forward.1} parent=0 // pred_check
    _
  $region31: #{decoder_forward.1} parent=0 // pred_check_branch
    %37 = sbr.rel (0) target = $region33
  $region32: #{decoder_forward.1} parent=0 // pred_region
    _
  $region33: #{decoder_forward.1} parent=0 // pred_fallthru
    _
  // Predicated region
  $region34: #{decoder_forward.1} parent=0 // pred_check
    _
  $region35: #{decoder_forward.1} parent=0 // pred_check_branch
    %39 = sbr.rel (0) target = $region37
  $region36: #{decoder_forward.1} parent=0 // pred_region
    _
  $region37: #{decoder_forward.1} parent=0 // pred_fallthru
    _
  // Predicated region
  $region38: #{decoder_forward.1} parent=0 // pred_check
    _
  $region39: #{decoder_forward.1} parent=0 // pred_check_branch
    %41 = sbr.rel (0) target = $region41
  $region40: #{decoder_forward.1} parent=0 // pred_region
    _
  $region41: #{decoder_forward.1} parent=0 // pred_fallthru
    _
  // Predicated region
  $region42: #{decoder_forward.1} parent=0 // pred_check
    _
  $region43: #{decoder_forward.1} parent=0 // pred_check_branch
    %43 = sbr.rel (0) target = $region45
  $region44: #{decoder_forward.1} parent=0 // pred_region
    _
  $region45: #{decoder_forward.1} parent=0 // pred_fallthru
    _
  // Predicated region
  $region46: #{decoder_forward.1} parent=0 // pred_check
    _
  $region47: #{decoder_forward.1} parent=0 // pred_check_branch
    %45 = sbr.rel (0) target = $region49
  $region48: #{decoder_forward.1} parent=0 // pred_region
    _
  $region49: #{decoder_forward.1} parent=0 // pred_fallthru
    _
  // Predicated region
  $region50: #{decoder_forward.1} parent=0 // pred_check
    _
  $region51: #{decoder_forward.1} parent=0 // pred_check_branch
    %47 = sbr.rel (0) target = $region53
  $region52: #{decoder_forward.1} parent=0 // pred_region
    _
  $region53: #{decoder_forward.1} parent=0 // pred_fallthru
    _
  %v49 = vld [vmem:[%s2] sm:$0xf]
  %v50 = vld [vmem:[%s2 + $0x4] sm:$0xf]
  %v51 = vld [vmem:[%s2 + $0x8] sm:$0xf]
  %v52 = vld [vmem:[%s2 + $0xc] sm:$0xf]
  %v53 = vld [vmem:[%s2 + $0x10] sm:$0xf]
  %v54 = vld [vmem:[%s2 + $0x14] sm:$0xf]
  %v55 = vld [vmem:[%s2 + $0x18] sm:$0xf]
  %v56 = vld [vmem:[%s2 + $0x1c] sm:$0xf]
  %v57 = vld [vmem:[%s0] sm:$0xff]
  %v58 = vld [vmem:[%s0 + $0x8] sm:$0xff]
  %v59 = vld [vmem:[%s0 + $0x10] sm:$0xff]
  %v60 = vld [vmem:[%s0 + $0x18] sm:$0xff]
  %v61 = vld [vmem:[%s3] sm:$0xf]
  %v62 = vld [vmem:[%s3 + $0x4] sm:$0xf]
  %v63 = vld [vmem:[%s3 + $0x8] sm:$0xf]
  %v64 = vld [vmem:[%s3 + $0xc] sm:$0xf]
  %v65 = vld [vmem:[%s3 + $0x10] sm:$0xf]
  %v66 = vld [vmem:[%s3 + $0x14] sm:$0xf]
  %v67 = vld [vmem:[%s3 + $0x18] sm:$0xf]
  %v68 = vld [vmem:[%s3 + $0x1c] sm:$0xf]
  %v69 = vld [vmem:[%s3 + $0x20] sm:$0xf]
  %v70 = vld [vmem:[%s3 + $0x24] sm:$0xf]
  %v71 = vld [vmem:[%s3 + $0x28] sm:$0xf]
  %v72 = vld [vmem:[%s3 + $0x2c] sm:$0xf]
  %v73 = vld [vmem:[%s3 + $0x30] sm:$0xf]
  %v74 = vld [vmem:[%s3 + $0x34] sm:$0xf]
  %v75 = vld [vmem:[%s3 + $0x38] sm:$0xf]
  %v76 = vld [vmem:[%s3 + $0x3c] sm:$0xf]
  %v77 = vld [vmem:[%s3 + $0x40] sm:$0xf]
  %v78 = vld [vmem:[%s3 + $0x44] sm:$0xf]
  %v79 = vld [vmem:[%s3 + $0x48] sm:$0xf]
  %v80 = vld [vmem:[%s3 + $0x4c] sm:$0xf]
  %v81 = vld [vmem:[%s3 + $0x50] sm:$0xf]
  %v82 = vld [vmem:[%s3 + $0x54] sm:$0xf]
  %v83 = vld [vmem:[%s3 + $0x58] sm:$0xf]
  %v84 = vld [vmem:[%s3 + $0x5c] sm:$0xf]
  %v85 = vld [vmem:[%s3 + $0x60] sm:$0xf]
  %v86 = vld [vmem:[%s3 + $0x64] sm:$0xf]
  %v87 = vld [vmem:[%s3 + $0x68] sm:$0xf]
  %v88 = vld [vmem:[%s3 + $0x6c] sm:$0xf]
  %v89 = vld [vmem:[%s3 + $0x70] sm:$0xf]
  %v90 = vld [vmem:[%s3 + $0x74] sm:$0xf]
  %v91 = vld [vmem:[%s3 + $0x78] sm:$0xf]
  %v92 = vld [vmem:[%s3 + $0x7c] sm:$0xf]
  %v93 = vld [vmem:[%s3 + $0x80] sm:$0xf]
  %v94 = vld [vmem:[%s3 + $0x84] sm:$0xf]
  %v95 = vld [vmem:[%s3 + $0x88] sm:$0xf]
  %v96 = vld [vmem:[%s3 + $0x8c] sm:$0xf]
  %v97 = vld [vmem:[%s3 + $0x90] sm:$0xf]
  %v98 = vld [vmem:[%s3 + $0x94] sm:$0xf]
  %v99 = vld [vmem:[%s3 + $0x98] sm:$0xf]
  %v100 = vld [vmem:[%s3 + $0x9c] sm:$0xf]
  %v101 = vld [vmem:[%s4] sm:$0x1]
  %v102 = vld [vmem:[%s5] sm:$0xf]
  %v103 = vld [vmem:[%s5 + $0x4] sm:$0xf]
  %v104 = vld [vmem:[%s5 + $0x8] sm:$0xf]
  %v105 = vld [vmem:[%s5 + $0xc] sm:$0xf]
  %v106 = vld [vmem:[%s5 + $0x10] sm:$0xf]
  %v107 = vld [vmem:[%s5 + $0x14] sm:$0xf]
  %v108 = vld [vmem:[%s5 + $0x18] sm:$0xf]
  %v109 = vld [vmem:[%s5 + $0x1c] sm:$0xf]
  %v110 = vld [vmem:[%s5 + $0x20] sm:$0xf]
  %v111 = vld [vmem:[%s5 + $0x24] sm:$0xf]
  %v112 = vld [vmem:[%s5 + $0x28] sm:$0xf]
  %v113 = vld [vmem:[%s5 + $0x2c] sm:$0xf]
  %v114 = vld [vmem:[%s5 + $0x30] sm:$0xf]
  %v115 = vld [vmem:[%s5 + $0x34] sm:$0xf]
  %v116 = vld [vmem:[%s5 + $0x38] sm:$0xf]
  %v117 = vld [vmem:[%s5 + $0x3c] sm:$0xf]
  %v118 = vld [vmem:[%s5 + $0x40] sm:$0xf]
  %v119 = vld [vmem:[%s5 + $0x44] sm:$0xf]
  %v120 = vld [vmem:[%s5 + $0x48] sm:$0xf]
  %v121 = vld [vmem:[%s5 + $0x4c] sm:$0xf]
  %v122 = vld [vmem:[%s6] sm:$0x1]
  %v123 = vld [vmem:[%s1] sm:$0xff]
  %v124 = vld [vmem:[%s1 + $0x8] sm:$0xff]
  %v125 = vld [vmem:[%s1 + $0x10] sm:$0xff]
  %v126 = vld [vmem:[%s1 + $0x18] sm:$0xff]
  %131 = vrot.lane.b32.xlu0 %v123, 32
  %v132 = vpop.permute.xlu0 %131
  %133 = vrot.lane.b32.xlu0 %v124, 32
  %v134 = vpop.permute.xlu0 %133
  %135 = vrot.lane.b32.xlu0 %v125, 32
  %v136 = vpop.permute.xlu0 %135
  %137 = vrot.lane.b32.xlu0 %v126, 32
  %v138 = vpop.permute.xlu0 %137
  %vm143 = vcmask 261120
  %v144 = vsel %vm143, %v57, %v132
  %v145 = vsel %vm143, %v58, %v134
  %v146 = vsel %vm143, %v59, %v136
  %v147 = vsel %vm143, %v60, %v138
  %vm148 = vcmask 523264
  %149 = vst.msk [vmem:[#allocation2] sm:$0xff] %vm148, %v144
  %150 = vst.msk [vmem:[#allocation2 + $0x18] sm:$0xff] %vm148, %v145
  %151 = vst.msk [vmem:[#allocation2 + $0x30] sm:$0xff] %vm148, %v146
  %152 = vst.msk [vmem:[#allocation2 + $0x48] sm:$0xff] %vm148, %v147
  %v153 = vpack.c.bf16 %v145, %v144
  %v154 = vpack.c.bf16 %v147, %v146
  %v159 = vunpack.c.l.b16 %v49
  %v160 = vunpack.c.l.b16 %v50
  %v161 = vunpack.c.l.b16 %v51
  %v162 = vunpack.c.l.b16 %v52
  %v163 = vpack.c.b16 %v160, %v159
  %v164 = vpack.c.b16 %v162, %v161
  %v166 = vsel %vm143, %v163, 0
  %v169 = vsel %vm143, %v164, 0
  %171 = vmatprep.subr.bf16.mxu0 0
  %172 = vmatpush1.bf16.msra.mxu0 0
  %173 = vmatprep.subr.bf16.mxu0 0
  %174 = vmatpush1.bf16.msra.mxu0 0
  %175 = vmatprep.subr.bf16.mxu0 0
  %176 = vmatpush1.bf16.msra.mxu0 0
  %177 = vmatprep.subr.bf16.mxu0 0
  %178 = vmatpush1.bf16.msra.mxu0 0
  %179 = vmatprep.subr.bf16.mxu0 0
  %180 = vmatpush1.bf16.msra.mxu0 0
  %181 = vmatprep.subr.bf16.mxu0 0
  %182 = vmatpush1.bf16.msra.mxu0 0
  %183 = vmatprep.subr.bf16.mxu0 0
  %184 = vmatpush1.bf16.msra.mxu0 %v154
  %185 = vmatprep.subr.bf16.mxu0 0
  %186 = vmatpush1.bf16.msra.mxu0 %v153
  %187 = vmatprep.subr.bf16.mxu0 0
  %188 = vmatpush2.bf16.msra.mxu0 0
  %189 = vmatprep.subr.bf16.mxu0 0
  %190 = vmatpush2.bf16.msra.mxu0 0
  %191 = vmatprep.subr.bf16.mxu0 0
  %192 = vmatpush2.bf16.msra.mxu0 0
  %193 = vmatprep.subr.bf16.mxu0 0
  %194 = vmatpush2.bf16.msra.mxu0 0
  %195 = vmatprep.subr.bf16.mxu0 0
  %196 = vmatpush2.bf16.msra.mxu0 0
  %197 = vmatprep.subr.bf16.mxu0 0
  %198 = vmatpush2.bf16.msra.mxu0 0
  %199 = vmatprep.subr.bf16.mxu0 0
  %200 = vmatpush2.bf16.msra.mxu0 0
  %201 = vmatprep.subr.bf16.mxu0 0
  %202 = vmatpush2.bf16.msra.mxu0 0
  %203 = vmatprep.mubr.bf16.mxu0 0
  %204 = vmatmul.mubr.bf16.gmra.mxu0 %v166
  %v205 = vpop.f32.mrf.mxu0
  %v206 = vadd.f32 0.0, %v205
  %v207 = vpop.f32.mrf.mxu0
  %v208 = vpop.f32.mrf.mxu0
  %v209 = vadd.f32 0.0, %v208
  %v210 = vpop.f32.mrf.mxu0
  %211 = vmatprep.mubr.bf16.mxu0 0
  %212 = vmatmul.mubr.bf16.gmra.mxu0 %v169
  %v213 = vpop.f32.mrf.mxu0
  %v214 = vadd.f32 0.0, %v213
  %v215 = vpop.f32.mrf.mxu0
  %v216 = vpop.f32.mrf.mxu0
  %v217 = vadd.f32 0.0, %v216
  %v218 = vpop.f32.mrf.mxu0
  %219 = vdwg.mxu0
  %224 = vrot.lane.b32.xlu0 %v206, 64
  %v225 = vpop.permute.xlu0 %224
  %226 = vrot.lane.b32.xlu0 %v209, 64
  %v227 = vpop.permute.xlu0 %226
  %228 = vrot.lane.b32.xlu0 %v214, 64
  %v229 = vpop.permute.xlu0 %228
  %230 = vrot.lane.b32.xlu0 %v217, 64
  %v231 = vpop.permute.xlu0 %230
  %vm236 = vcmask 1048064
  %237 = vst.msk [vmem:[#allocation2] sm:$0xff] %vm236, %v225
  %238 = vst.msk [vmem:[#allocation2 + $0x18] sm:$0xff] %vm236, %v227
  %239 = vst.msk [vmem:[#allocation2 + $0x30] sm:$0xff] %vm236, %v229
  %240 = vst.msk [vmem:[#allocation2 + $0x48] sm:$0xff] %vm236, %v231
  %v241 = vpack.c.bf16 %v209, %v206
  %v242 = vpack.c.bf16 %v217, %v214
  %243 = vmatprep.subr.bf16.mxu0 0
  %244 = vmatpush1.bf16.msra.mxu0 0
  %245 = vmatprep.subr.bf16.mxu0 0
  %246 = vmatpush1.bf16.msra.mxu0 0
  %247 = vmatprep.subr.bf16.mxu0 0
  %248 = vmatpush1.bf16.msra.mxu0 0
  %249 = vmatprep.subr.bf16.mxu0 0
  %250 = vmatpush1.bf16.msra.mxu0 0
  %251 = vmatprep.subr.bf16.mxu0 0
  %252 = vmatpush1.bf16.msra.mxu0 0
  %253 = vmatprep.subr.bf16.mxu0 0
  %254 = vmatpush1.bf16.msra.mxu0 0
  %255 = vmatprep.subr.bf16.mxu0 0
  %256 = vmatpush1.bf16.msra.mxu0 %v242
  %257 = vmatprep.subr.bf16.mxu0 0
  %258 = vmatpush1.bf16.msra.mxu0 %v241
  %259 = vmatprep.subr.bf16.mxu0 0
  %260 = vmatpush2.bf16.msra.mxu0 0
  %261 = vmatprep.subr.bf16.mxu0 0
  %262 = vmatpush2.bf16.msra.mxu0 0
  %263 = vmatprep.subr.bf16.mxu0 0
  %264 = vmatpush2.bf16.msra.mxu0 0
  %265 = vmatprep.subr.bf16.mxu0 0
  %266 = vmatpush2.bf16.msra.mxu0 0
  %267 = vmatprep.subr.bf16.mxu0 0
  %268 = vmatpush2.bf16.msra.mxu0 0
  %269 = vmatprep.subr.bf16.mxu0 0
  %270 = vmatpush2.bf16.msra.mxu0 0
  %271 = vmatprep.subr.bf16.mxu0 0
  %272 = vmatpush2.bf16.msra.mxu0 0
  %273 = vmatprep.subr.bf16.mxu0 0
  %274 = vmatpush2.bf16.msra.mxu0 0
  %275 = vmatprep.mubr.bf16.mxu0 0
  %276 = vmatmul.mubr.bf16.gmra.mxu0 %v166
  %v277 = vpop.f32.mrf.mxu0
  %v278 = vadd.f32 0.0, %v277
  %v279 = vpop.f32.mrf.mxu0
  %v280 = vpop.f32.mrf.mxu0
  %v281 = vadd.f32 0.0, %v280
  %v282 = vpop.f32.mrf.mxu0
  %283 = vmatprep.mubr.bf16.mxu0 0
  %284 = vmatmul.mubr.bf16.gmra.mxu0 %v169
  %v285 = vpop.f32.mrf.mxu0
  %v286 = vadd.f32 0.0, %v285
  %v287 = vpop.f32.mrf.mxu0
  %v288 = vpop.f32.mrf.mxu0
  %v289 = vadd.f32 0.0, %v288
  %v290 = vpop.f32.mrf.mxu0
  %291 = vdwg.mxu0
  %v292 = vmul.f32 %v278, 2.0
  %v293 = vmul.f32 %v281, 2.0
  %v294 = vmul.f32 %v286, 2.0
  %v295 = vmul.f32 %v289, 2.0
  %v296 = vsub.f32 %v292, %v144
  %v297 = vsub.f32 %v293, %v145
  %v298 = vsub.f32 %v294, %v146
  %v299 = vsub.f32 %v295, %v147
  %300 = vst.msk [vmem:[#allocation2 + $0x8] sm:$0xff] %vm148, %v296
  %301 = vst.msk [vmem:[#allocation2 + $0x20] sm:$0xff] %vm148, %v297
  %302 = vst.msk [vmem:[#allocation2 + $0x38] sm:$0xff] %vm148, %v298
  %303 = vst.msk [vmem:[#allocation2 + $0x50] sm:$0xff] %vm148, %v299
  %v308 = vunpack.c.l.b16 %v53
  %v309 = vunpack.c.l.b16 %v54
  %v310 = vunpack.c.l.b16 %v55
  %v311 = vunpack.c.l.b16 %v56
  %v312 = vpack.c.b16 %v309, %v308
  %v313 = vpack.c.b16 %v311, %v310
  %v315 = vsel %vm143, %v312, 0
  %v318 = vsel %vm143, %v313, 0
  %320 = vmatprep.subr.bf16.mxu0 0
  %321 = vmatpush1.bf16.msra.mxu0 0
  %322 = vmatprep.subr.bf16.mxu0 0
  %323 = vmatpush1.bf16.msra.mxu0 0
  %324 = vmatprep.subr.bf16.mxu0 0
  %325 = vmatpush1.bf16.msra.mxu0 0
  %326 = vmatprep.subr.bf16.mxu0 0
  %327 = vmatpush1.bf16.msra.mxu0 0
  %328 = vmatprep.subr.bf16.mxu0 0
  %329 = vmatpush1.bf16.msra.mxu0 0
  %330 = vmatprep.subr.bf16.mxu0 0
  %331 = vmatpush1.bf16.msra.mxu0 0
  %332 = vmatprep.subr.bf16.mxu0 0
  %333 = vmatpush1.bf16.msra.mxu0 %v242
  %334 = vmatprep.subr.bf16.mxu0 0
  %335 = vmatpush1.bf16.msra.mxu0 %v241
  %336 = vmatprep.subr.bf16.mxu0 0
  %337 = vmatpush2.bf16.msra.mxu0 0
  %338 = vmatprep.subr.bf16.mxu0 0
  %339 = vmatpush2.bf16.msra.mxu0 0
  %340 = vmatprep.subr.bf16.mxu0 0
  %341 = vmatpush2.bf16.msra.mxu0 0
  %342 = vmatprep.subr.bf16.mxu0 0
  %343 = vmatpush2.bf16.msra.mxu0 0
  %344 = vmatprep.subr.bf16.mxu0 0
  %345 = vmatpush2.bf16.msra.mxu0 0
  %346 = vmatprep.subr.bf16.mxu0 0
  %347 = vmatpush2.bf16.msra.mxu0 0
  %348 = vmatprep.subr.bf16.mxu0 0
  %349 = vmatpush2.bf16.msra.mxu0 0
  %350 = vmatprep.subr.bf16.mxu0 0
  %351 = vmatpush2.bf16.msra.mxu0 0
  %352 = vmatprep.mubr.bf16.mxu0 0
  %353 = vmatmul.mubr.bf16.gmra.mxu0 %v315
  %v354 = vpop.f32.mrf.mxu0
  %v355 = vadd.f32 0.0, %v354
  %v356 = vpop.f32.mrf.mxu0
  %v357 = vpop.f32.mrf.mxu0
  %v358 = vadd.f32 0.0, %v357
  %v359 = vpop.f32.mrf.mxu0
  %360 = vmatprep.mubr.bf16.mxu0 0
  %361 = vmatmul.mubr.bf16.gmra.mxu0 %v318
  %v362 = vpop.f32.mrf.mxu0
  %v363 = vadd.f32 0.0, %v362
  %v364 = vpop.f32.mrf.mxu0
  %v365 = vpop.f32.mrf.mxu0
  %v366 = vadd.f32 0.0, %v365
  %v367 = vpop.f32.mrf.mxu0
  %368 = vdwg.mxu0
  %373 = vrot.lane.b32.xlu0 %v355, 64
  %v374 = vpop.permute.xlu0 %373
  %375 = vrot.lane.b32.xlu0 %v358, 64
  %v376 = vpop.permute.xlu0 %375
  %377 = vrot.lane.b32.xlu0 %v363, 64
  %v378 = vpop.permute.xlu0 %377
  %379 = vrot.lane.b32.xlu0 %v366, 64
  %v380 = vpop.permute.xlu0 %379
  %385 = vst.msk [vmem:[#allocation2 + $0x8] sm:$0xff] %vm236, %v374
  %386 = vst.msk [vmem:[#allocation2 + $0x20] sm:$0xff] %vm236, %v376
  %387 = vst.msk [vmem:[#allocation2 + $0x38] sm:$0xff] %vm236, %v378
  %388 = vst.msk [vmem:[#allocation2 + $0x50] sm:$0xff] %vm236, %v380
  %v389 = vpack.c.bf16 %v358, %v355
  %v390 = vpack.c.bf16 %v366, %v363
  %391 = vmatprep.subr.bf16.mxu0 0
  %392 = vmatpush1.bf16.msra.mxu0 0
  %393 = vmatprep.subr.bf16.mxu0 0
  %394 = vmatpush1.bf16.msra.mxu0 0
  %395 = vmatprep.subr.bf16.mxu0 0
  %396 = vmatpush1.bf16.msra.mxu0 0
  %397 = vmatprep.subr.bf16.mxu0 0
  %398 = vmatpush1.bf16.msra.mxu0 0
  %399 = vmatprep.subr.bf16.mxu0 0
  %400 = vmatpush1.bf16.msra.mxu0 0
  %401 = vmatprep.subr.bf16.mxu0 0
  %402 = vmatpush1.bf16.msra.mxu0 0
  %403 = vmatprep.subr.bf16.mxu0 0
  %404 = vmatpush1.bf16.msra.mxu0 %v390
  %405 = vmatprep.subr.bf16.mxu0 0
  %406 = vmatpush1.bf16.msra.mxu0 %v389
  %407 = vmatprep.subr.bf16.mxu0 0
  %408 = vmatpush2.bf16.msra.mxu0 0
  %409 = vmatprep.subr.bf16.mxu0 0
  %410 = vmatpush2.bf16.msra.mxu0 0
  %411 = vmatprep.subr.bf16.mxu0 0
  %412 = vmatpush2.bf16.msra.mxu0 0
  %413 = vmatprep.subr.bf16.mxu0 0
  %414 = vmatpush2.bf16.msra.mxu0 0
  %415 = vmatprep.subr.bf16.mxu0 0
  %416 = vmatpush2.bf16.msra.mxu0 0
  %417 = vmatprep.subr.bf16.mxu0 0
  %418 = vmatpush2.bf16.msra.mxu0 0
  %419 = vmatprep.subr.bf16.mxu0 0
  %420 = vmatpush2.bf16.msra.mxu0 0
  %421 = vmatprep.subr.bf16.mxu0 0
  %422 = vmatpush2.bf16.msra.mxu0 0
  %423 = vmatprep.mubr.bf16.mxu0 0
  %424 = vmatmul.mubr.bf16.gmra.mxu0 %v315
  %v425 = vpop.f32.mrf.mxu0
  %v426 = vadd.f32 0.0, %v425
  %v427 = vpop.f32.mrf.mxu0
  %v428 = vpop.f32.mrf.mxu0
  %v429 = vadd.f32 0.0, %v428
  %v430 = vpop.f32.mrf.mxu0
  %431 = vmatprep.mubr.bf16.mxu0 0
  %432 = vmatmul.mubr.bf16.gmra.mxu0 %v318
  %v433 = vpop.f32.mrf.mxu0
  %v434 = vadd.f32 0.0, %v433
  %v435 = vpop.f32.mrf.mxu0
  %v436 = vpop.f32.mrf.mxu0
  %v437 = vadd.f32 0.0, %v436
  %v438 = vpop.f32.mrf.mxu0
  %439 = vdwg.mxu0
  %v440 = vmul.f32 %v426, 2.0
  %v441 = vmul.f32 %v429, 2.0
  %v442 = vmul.f32 %v434, 2.0
  %v443 = vmul.f32 %v437, 2.0
  %v444 = vsub.f32 %v440, %v206
  %v445 = vsub.f32 %v441, %v209
  %v446 = vsub.f32 %v442, %v214
  %v447 = vsub.f32 %v443, %v217
  %448 = vst.msk [vmem:[#allocation2 + $0x10] sm:$0xff] %vm148, %v444
  %449 = vst.msk [vmem:[#allocation2 + $0x28] sm:$0xff] %vm148, %v445
  %450 = vst.msk [vmem:[#allocation2 + $0x40] sm:$0xff] %vm148, %v446
  %451 = vst.msk [vmem:[#allocation2 + $0x58] sm:$0xff] %vm148, %v447
  %v452 = vld [vmem:[#allocation2] sm:$0xff]
  %v453 = vld [vmem:[#allocation2 + $0x8] sm:$0xff]
  %v454 = vld [vmem:[#allocation2 + $0x10] sm:$0xff]
  %v455 = vld [vmem:[#allocation2 + $0x18] sm:$0xff]
  %v456 = vld [vmem:[#allocation2 + $0x20] sm:$0xff]
  %v457 = vld [vmem:[#allocation2 + $0x28] sm:$0xff]
  %v458 = vld [vmem:[#allocation2 + $0x30] sm:$0xff]
  %v459 = vld [vmem:[#allocation2 + $0x38] sm:$0xff]
  %v460 = vld [vmem:[#allocation2 + $0x40] sm:$0xff]
  %v461 = vld [vmem:[#allocation2 + $0x48] sm:$0xff]
  %v462 = vld [vmem:[#allocation2 + $0x50] sm:$0xff]
  %v463 = vld [vmem:[#allocation2 + $0x58] sm:$0xff]
  %v464 = vpack.c.bf16 %v455, %v452
  %v465 = vpack.c.bf16 %v456, %v453
  %v466 = vpack.c.bf16 %v457, %v454
  %v467 = vpack.c.bf16 %v461, %v458
  %v468 = vpack.c.bf16 %v462, %v459
  %v469 = vpack.c.bf16 %v463, %v460
  %v471 = vlaneseq
  %v472 = vshrl.u32 %v471, 7
  %v473 = vsub.s32 0, %v472
  %v474 = vrot.slane %v101, %v473
  %v516 = vunpack.c.l.b16 %v61
  %v517 = vunpack.c.l.b16 %v62
  %v518 = vunpack.c.l.b16 %v63
  %v519 = vunpack.c.l.b16 %v64
  %v520 = vunpack.c.l.b16 %v65
  %v521 = vunpack.c.l.b16 %v66
  %v522 = vunpack.c.l.b16 %v67
  %v523 = vunpack.c.l.b16 %v68
  %v524 = vunpack.c.l.b16 %v69
  %v525 = vunpack.c.l.b16 %v70
  %v526 = vunpack.c.l.b16 %v71
  %v527 = vunpack.c.l.b16 %v72
  %v528 = vunpack.c.l.b16 %v73
  %v529 = vunpack.c.l.b16 %v74
  %v530 = vunpack.c.l.b16 %v75
  %v531 = vunpack.c.l.b16 %v76
  %v532 = vunpack.c.l.b16 %v77
  %v533 = vunpack.c.l.b16 %v78
  %v534 = vunpack.c.l.b16 %v79
  %v535 = vunpack.c.l.b16 %v80
  %v536 = vunpack.c.l.b16 %v81
  %v537 = vunpack.c.l.b16 %v82
  %v538 = vunpack.c.l.b16 %v83
  %v539 = vunpack.c.l.b16 %v84
  %v540 = vunpack.c.l.b16 %v85
  %v541 = vunpack.c.l.b16 %v86
  %v542 = vunpack.c.l.b16 %v87
  %v543 = vunpack.c.l.b16 %v88
  %v544 = vunpack.c.l.b16 %v89
  %v545 = vunpack.c.l.b16 %v90
  %v546 = vunpack.c.l.b16 %v91
  %v547 = vunpack.c.l.b16 %v92
  %v548 = vunpack.c.l.b16 %v93
  %v549 = vunpack.c.l.b16 %v94
  %v550 = vunpack.c.l.b16 %v95
  %v551 = vunpack.c.l.b16 %v96
  %v552 = vunpack.c.l.b16 %v97
  %v553 = vunpack.c.l.b16 %v98
  %v554 = vunpack.c.l.b16 %v99
  %v555 = vunpack.c.l.b16 %v100
  %v556 = vpack.c.b16 %v517, %v516
  %v557 = vpack.c.b16 %v519, %v518
  %v558 = vpack.c.b16 %v521, %v520
  %v559 = vpack.c.b16 %v523, %v522
  %v560 = vpack.c.b16 %v525, %v524
  %v561 = vpack.c.b16 %v527, %v526
  %v562 = vpack.c.b16 %v529, %v528
  %v563 = vpack.c.b16 %v531, %v530
  %v564 = vpack.c.b16 %v533, %v532
  %v565 = vpack.c.b16 %v535, %v534
  %v566 = vpack.c.b16 %v537, %v536
  %v567 = vpack.c.b16 %v539, %v538
  %v568 = vpack.c.b16 %v541, %v540
  %v569 = vpack.c.b16 %v543, %v542
  %v570 = vpack.c.b16 %v545, %v544
  %v571 = vpack.c.b16 %v547, %v546
  %v572 = vpack.c.b16 %v549, %v548
  %v573 = vpack.c.b16 %v551, %v550
  %v574 = vpack.c.b16 %v553, %v552
  %v575 = vpack.c.b16 %v555, %v554
  %v597 = vsel %vm148, %v466, 0
  %v600 = vsel %vm148, %v469, 0
  %602 = vmatprep.subr.bf16.mxu0 0
  %603 = vmatpush1.bf16.msra.mxu0 %v563
  %604 = vmatprep.subr.bf16.mxu0 0
  %605 = vmatpush1.bf16.msra.mxu0 %v562
  %606 = vmatprep.subr.bf16.mxu0 0
  %607 = vmatpush1.bf16.msra.mxu0 %v561
  %608 = vmatprep.subr.bf16.mxu0 0
  %609 = vmatpush1.bf16.msra.mxu0 %v560
  %610 = vmatprep.subr.bf16.mxu0 0
  %611 = vmatpush1.bf16.msra.mxu0 %v559
  %612 = vmatprep.subr.bf16.mxu0 0
  %613 = vmatpush1.bf16.msra.mxu0 %v558
  %614 = vmatprep.subr.bf16.mxu0 0
  %615 = vmatpush1.bf16.msra.mxu0 %v557
  %616 = vmatprep.subr.bf16.mxu0 0
  %617 = vmatpush1.bf16.msra.mxu0 %v556
  %618 = vmatprep.subr.bf16.mxu0 0
  %619 = vmatpush2.bf16.msra.mxu0 %v571
  %620 = vmatprep.subr.bf16.mxu0 0
  %621 = vmatpush2.bf16.msra.mxu0 %v570
  %622 = vmatprep.subr.bf16.mxu0 0
  %623 = vmatpush2.bf16.msra.mxu0 %v569
  %624 = vmatprep.subr.bf16.mxu0 0
  %625 = vmatpush2.bf16.msra.mxu0 %v568
  %626 = vmatprep.subr.bf16.mxu0 0
  %627 = vmatpush2.bf16.msra.mxu0 %v567
  %628 = vmatprep.subr.bf16.mxu0 0
  %629 = vmatpush2.bf16.msra.mxu0 %v566
  %630 = vmatprep.subr.bf16.mxu0 0
  %631 = vmatpush2.bf16.msra.mxu0 %v565
  %632 = vmatprep.subr.bf16.mxu0 0
  %633 = vmatpush2.bf16.msra.mxu0 %v564
  %634 = vmatprep.mubr.bf16.mxu0 %v465
  %635 = vmatmul.mubr.bf16.gmra.mxu0 %v464
  %v636 = vpop.f32.mrf.mxu0
  %v637 = vadd.f32 %v474, %v636
  %v638 = vpop.f32.mrf.mxu0
  %v639 = vpop.f32.mrf.mxu0
  %v640 = vadd.f32 %v474, %v639
  %v641 = vpop.f32.mrf.mxu0
  %642 = vmatprep.mubr.bf16.mxu0 %v468
  %643 = vmatmul.mubr.bf16.gmra.mxu0 %v467
  %v644 = vpop.f32.mrf.mxu0
  %v645 = vadd.f32 %v474, %v644
  %v646 = vpop.f32.mrf.mxu0
  %v647 = vpop.f32.mrf.mxu0
  %v648 = vadd.f32 %v474, %v647
  %v649 = vpop.f32.mrf.mxu0
  %650 = vdwg.mxu0
  %651 = vmatprep.subr.bf16.mxu0 0
  %652 = vmatpush1.bf16.msra.mxu0 0
  %653 = vmatprep.subr.bf16.mxu0 0
  %654 = vmatpush1.bf16.msra.mxu0 0
  %655 = vmatprep.subr.bf16.mxu0 0
  %656 = vmatpush1.bf16.msra.mxu0 0
  %657 = vmatprep.subr.bf16.mxu0 0
  %658 = vmatpush1.bf16.msra.mxu0 0
  %659 = vmatprep.subr.bf16.mxu0 0
  %660 = vmatpush1.bf16.msra.mxu0 %v575
  %661 = vmatprep.subr.bf16.mxu0 0
  %662 = vmatpush1.bf16.msra.mxu0 %v574
  %663 = vmatprep.subr.bf16.mxu0 0
  %664 = vmatpush1.bf16.msra.mxu0 %v573
  %665 = vmatprep.subr.bf16.mxu0 0
  %666 = vmatpush1.bf16.msra.mxu0 %v572
  %667 = vmatprep.subr.bf16.mxu0 0
  %668 = vmatpush2.bf16.msra.mxu0 0
  %669 = vmatprep.subr.bf16.mxu0 0
  %670 = vmatpush2.bf16.msra.mxu0 0
  %671 = vmatprep.subr.bf16.mxu0 0
  %672 = vmatpush2.bf16.msra.mxu0 0
  %673 = vmatprep.subr.bf16.mxu0 0
  %674 = vmatpush2.bf16.msra.mxu0 0
  %675 = vmatprep.subr.bf16.mxu0 0
  %676 = vmatpush2.bf16.msra.mxu0 0
  %677 = vmatprep.subr.bf16.mxu0 0
  %678 = vmatpush2.bf16.msra.mxu0 0
  %679 = vmatprep.subr.bf16.mxu0 0
  %680 = vmatpush2.bf16.msra.mxu0 0
  %681 = vmatprep.subr.bf16.mxu0 0
  %682 = vmatpush2.bf16.msra.mxu0 0
  %683 = vmatprep.mubr.bf16.mxu0 0
  %684 = vmatmul.mubr.bf16.gmra.mxu0 %v597
  %v685 = vpop.f32.mrf.mxu0
  %v686 = vadd.f32 %v637, %v685
  %v687 = vpop.f32.mrf.mxu0
  %v688 = vpop.f32.mrf.mxu0
  %v689 = vadd.f32 %v640, %v688
  %v690 = vpop.f32.mrf.mxu0
  %691 = vmatprep.mubr.bf16.mxu0 0
  %692 = vmatmul.mubr.bf16.gmra.mxu0 %v600
  %v693 = vpop.f32.mrf.mxu0
  %v694 = vadd.f32 %v645, %v693
  %v695 = vpop.f32.mrf.mxu0
  %v696 = vpop.f32.mrf.mxu0
  %v697 = vadd.f32 %v648, %v696
  %v698 = vpop.f32.mrf.mxu0
  %699 = vdwg.mxu0
  %v700 = vmul.f32 %v686, 0.5
  %v701 = vmul.f32 %v689, 0.5
  %v702 = vmul.f32 %v694, 0.5
  %v703 = vmul.f32 %v697, 0.5
  %v704 = vtanh.pop %v700
  %v705 = vtanh.pop %v701
  %v706 = vtanh.pop %v702
  %v707 = vtanh.pop %v703
  %v708 = vadd.f32 %v704, 1.0
  %v709 = vadd.f32 %v705, 1.0
  %v710 = vadd.f32 %v706, 1.0
  %v711 = vadd.f32 %v707, 1.0
  %v712 = vmul.f32 %v708, 0.5
  %v713 = vmul.f32 %v709, 0.5
  %v714 = vmul.f32 %v710, 0.5
  %v715 = vmul.f32 %v711, 0.5
  %v716 = vmul.f32 %v712, %v123
  %v717 = vmul.f32 %v713, %v124
  %v718 = vmul.f32 %v714, %v125
  %v719 = vmul.f32 %v715, %v126
  %720 = vst.msk [vmem:[#allocation3] sm:$0xff] %vm143, %v716
  %721 = vst.msk [vmem:[#allocation3 + $0x10] sm:$0xff] %vm143, %v717
  %722 = vst.msk [vmem:[#allocation3 + $0x20] sm:$0xff] %vm143, %v718
  %723 = vst.msk [vmem:[#allocation3 + $0x30] sm:$0xff] %vm143, %v719
  %v724 = vpack.c.bf16 %v717, %v716
  %v725 = vpack.c.bf16 %v719, %v718
  %726 = vmatprep.subr.bf16.mxu0 0
  %727 = vmatpush1.bf16.msra.mxu0 0
  %728 = vmatprep.subr.bf16.mxu0 0
  %729 = vmatpush1.bf16.msra.mxu0 0
  %730 = vmatprep.subr.bf16.mxu0 0
  %731 = vmatpush1.bf16.msra.mxu0 0
  %732 = vmatprep.subr.bf16.mxu0 0
  %733 = vmatpush1.bf16.msra.mxu0 0
  %734 = vmatprep.subr.bf16.mxu0 0
  %735 = vmatpush1.bf16.msra.mxu0 0
  %736 = vmatprep.subr.bf16.mxu0 0
  %737 = vmatpush1.bf16.msra.mxu0 0
  %738 = vmatprep.subr.bf16.mxu0 0
  %739 = vmatpush1.bf16.msra.mxu0 %v725
  %740 = vmatprep.subr.bf16.mxu0 0
  %741 = vmatpush1.bf16.msra.mxu0 %v724
  %742 = vmatprep.subr.bf16.mxu0 0
  %743 = vmatpush2.bf16.msra.mxu0 0
  %744 = vmatprep.subr.bf16.mxu0 0
  %745 = vmatpush2.bf16.msra.mxu0 0
  %746 = vmatprep.subr.bf16.mxu0 0
  %747 = vmatpush2.bf16.msra.mxu0 0
  %748 = vmatprep.subr.bf16.mxu0 0
  %749 = vmatpush2.bf16.msra.mxu0 0
  %750 = vmatprep.subr.bf16.mxu0 0
  %751 = vmatpush2.bf16.msra.mxu0 0
  %752 = vmatprep.subr.bf16.mxu0 0
  %753 = vmatpush2.bf16.msra.mxu0 0
  %754 = vmatprep.subr.bf16.mxu0 0
  %755 = vmatpush2.bf16.msra.mxu0 0
  %756 = vmatprep.subr.bf16.mxu0 0
  %757 = vmatpush2.bf16.msra.mxu0 0
  %758 = vmatprep.mubr.bf16.mxu0 0
  %759 = vmatmul.mubr.bf16.gmra.mxu0 %v166
  %v760 = vpop.f32.mrf.mxu0
  %v761 = vadd.f32 0.0, %v760
  %v762 = vpop.f32.mrf.mxu0
  %v763 = vpop.f32.mrf.mxu0
  %v764 = vadd.f32 0.0, %v763
  %v765 = vpop.f32.mrf.mxu0
  %766 = vmatprep.mubr.bf16.mxu0 0
  %767 = vmatmul.mubr.bf16.gmra.mxu0 %v169
  %v768 = vpop.f32.mrf.mxu0
  %v769 = vadd.f32 0.0, %v768
  %v770 = vpop.f32.mrf.mxu0
  %v771 = vpop.f32.mrf.mxu0
  %v772 = vadd.f32 0.0, %v771
  %v773 = vpop.f32.mrf.mxu0
  %774 = vdwg.mxu0
  %779 = vrot.lane.b32.xlu0 %v761, 32
  %v780 = vpop.permute.xlu0 %779
  %781 = vrot.lane.b32.xlu0 %v764, 32
  %v782 = vpop.permute.xlu0 %781
  %783 = vrot.lane.b32.xlu0 %v769, 32
  %v784 = vpop.permute.xlu0 %783
  %785 = vrot.lane.b32.xlu0 %v772, 32
  %v786 = vpop.permute.xlu0 %785
  %vm791 = vcmask 523520
  %792 = vst.msk [vmem:[#allocation3] sm:$0xff] %vm791, %v780
  %793 = vst.msk [vmem:[#allocation3 + $0x10] sm:$0xff] %vm791, %v782
  %794 = vst.msk [vmem:[#allocation3 + $0x20] sm:$0xff] %vm791, %v784
  %795 = vst.msk [vmem:[#allocation3 + $0x30] sm:$0xff] %vm791, %v786
  %v796 = vpack.c.bf16 %v764, %v761
  %v797 = vpack.c.bf16 %v772, %v769
  %798 = vmatprep.subr.bf16.mxu0 0
  %799 = vmatpush1.bf16.msra.mxu0 0
  %800 = vmatprep.subr.bf16.mxu0 0
  %801 = vmatpush1.bf16.msra.mxu0 0
  %802 = vmatprep.subr.bf16.mxu0 0
  %803 = vmatpush1.bf16.msra.mxu0 0
  %804 = vmatprep.subr.bf16.mxu0 0
  %805 = vmatpush1.bf16.msra.mxu0 0
  %806 = vmatprep.subr.bf16.mxu0 0
  %807 = vmatpush1.bf16.msra.mxu0 0
  %808 = vmatprep.subr.bf16.mxu0 0
  %809 = vmatpush1.bf16.msra.mxu0 0
  %810 = vmatprep.subr.bf16.mxu0 0
  %811 = vmatpush1.bf16.msra.mxu0 %v797
  %812 = vmatprep.subr.bf16.mxu0 0
  %813 = vmatpush1.bf16.msra.mxu0 %v796
  %814 = vmatprep.subr.bf16.mxu0 0
  %815 = vmatpush2.bf16.msra.mxu0 0
  %816 = vmatprep.subr.bf16.mxu0 0
  %817 = vmatpush2.bf16.msra.mxu0 0
  %818 = vmatprep.subr.bf16.mxu0 0
  %819 = vmatpush2.bf16.msra.mxu0 0
  %820 = vmatprep.subr.bf16.mxu0 0
  %821 = vmatpush2.bf16.msra.mxu0 0
  %822 = vmatprep.subr.bf16.mxu0 0
  %823 = vmatpush2.bf16.msra.mxu0 0
  %824 = vmatprep.subr.bf16.mxu0 0
  %825 = vmatpush2.bf16.msra.mxu0 0
  %826 = vmatprep.subr.bf16.mxu0 0
  %827 = vmatpush2.bf16.msra.mxu0 0
  %828 = vmatprep.subr.bf16.mxu0 0
  %829 = vmatpush2.bf16.msra.mxu0 0
  %830 = vmatprep.mubr.bf16.mxu0 0
  %831 = vmatmul.mubr.bf16.gmra.mxu0 %v166
  %v832 = vpop.f32.mrf.mxu0
  %v833 = vadd.f32 0.0, %v832
  %v834 = vpop.f32.mrf.mxu0
  %v835 = vpop.f32.mrf.mxu0
  %v836 = vadd.f32 0.0, %v835
  %v837 = vpop.f32.mrf.mxu0
  %838 = vmatprep.mubr.bf16.mxu0 0
  %839 = vmatmul.mubr.bf16.gmra.mxu0 %v169
  %v840 = vpop.f32.mrf.mxu0
  %v841 = vadd.f32 0.0, %v840
  %v842 = vpop.f32.mrf.mxu0
  %v843 = vpop.f32.mrf.mxu0
  %v844 = vadd.f32 0.0, %v843
  %v845 = vpop.f32.mrf.mxu0
  %846 = vdwg.mxu0
  %v847 = vmul.f32 %v833, 2.0
  %v848 = vmul.f32 %v836, 2.0
  %v849 = vmul.f32 %v841, 2.0
  %v850 = vmul.f32 %v844, 2.0
  %v851 = vsub.f32 %v847, %v716
  %v852 = vsub.f32 %v848, %v717
  %v853 = vsub.f32 %v849, %v718
  %v854 = vsub.f32 %v850, %v719
  %859 = vrot.lane.b32.xlu0 %v851, 64
  %v860 = vpop.permute.xlu0 %859
  %861 = vrot.lane.b32.xlu0 %v852, 64
  %v862 = vpop.permute.xlu0 %861
  %863 = vrot.lane.b32.xlu0 %v853, 64
  %v864 = vpop.permute.xlu0 %863
  %865 = vrot.lane.b32.xlu0 %v854, 64
  %v866 = vpop.permute.xlu0 %865
  %vm871 = vcmask 785920
  %872 = vst.msk [vmem:[#allocation3] sm:$0xff] %vm871, %v860
  %873 = vst.msk [vmem:[#allocation3 + $0x10] sm:$0xff] %vm871, %v862
  %874 = vst.msk [vmem:[#allocation3 + $0x20] sm:$0xff] %vm871, %v864
  %875 = vst.msk [vmem:[#allocation3 + $0x30] sm:$0xff] %vm871, %v866
  %876 = vmatprep.subr.bf16.mxu0 0
  %877 = vmatpush1.bf16.msra.mxu0 0
  %878 = vmatprep.subr.bf16.mxu0 0
  %879 = vmatpush1.bf16.msra.mxu0 0
  %880 = vmatprep.subr.bf16.mxu0 0
  %881 = vmatpush1.bf16.msra.mxu0 0
  %882 = vmatprep.subr.bf16.mxu0 0
  %883 = vmatpush1.bf16.msra.mxu0 0
  %884 = vmatprep.subr.bf16.mxu0 0
  %885 = vmatpush1.bf16.msra.mxu0 0
  %886 = vmatprep.subr.bf16.mxu0 0
  %887 = vmatpush1.bf16.msra.mxu0 0
  %888 = vmatprep.subr.bf16.mxu0 0
  %889 = vmatpush1.bf16.msra.mxu0 %v797
  %890 = vmatprep.subr.bf16.mxu0 0
  %891 = vmatpush1.bf16.msra.mxu0 %v796
  %892 = vmatprep.subr.bf16.mxu0 0
  %893 = vmatpush2.bf16.msra.mxu0 0
  %894 = vmatprep.subr.bf16.mxu0 0
  %895 = vmatpush2.bf16.msra.mxu0 0
  %896 = vmatprep.subr.bf16.mxu0 0
  %897 = vmatpush2.bf16.msra.mxu0 0
  %898 = vmatprep.subr.bf16.mxu0 0
  %899 = vmatpush2.bf16.msra.mxu0 0
  %900 = vmatprep.subr.bf16.mxu0 0
  %901 = vmatpush2.bf16.msra.mxu0 0
  %902 = vmatprep.subr.bf16.mxu0 0
  %903 = vmatpush2.bf16.msra.mxu0 0
  %904 = vmatprep.subr.bf16.mxu0 0
  %905 = vmatpush2.bf16.msra.mxu0 0
  %906 = vmatprep.subr.bf16.mxu0 0
  %907 = vmatpush2.bf16.msra.mxu0 0
  %908 = vmatprep.mubr.bf16.mxu0 0
  %909 = vmatmul.mubr.bf16.gmra.mxu0 %v315
  %v910 = vpop.f32.mrf.mxu0
  %v911 = vadd.f32 0.0, %v910
  %v912 = vpop.f32.mrf.mxu0
  %v913 = vpop.f32.mrf.mxu0
  %v914 = vadd.f32 0.0, %v913
  %v915 = vpop.f32.mrf.mxu0
  %916 = vmatprep.mubr.bf16.mxu0 0
  %917 = vmatmul.mubr.bf16.gmra.mxu0 %v318
  %v918 = vpop.f32.mrf.mxu0
  %v919 = vadd.f32 0.0, %v918
  %v920 = vpop.f32.mrf.mxu0
  %v921 = vpop.f32.mrf.mxu0
  %v922 = vadd.f32 0.0, %v921
  %v923 = vpop.f32.mrf.mxu0
  %924 = vdwg.mxu0
  %929 = vrot.lane.b32.xlu0 %v911, 96
  %v930 = vpop.permute.xlu0 %929
  %931 = vrot.lane.b32.xlu0 %v914, 96
  %v932 = vpop.permute.xlu0 %931
  %933 = vrot.lane.b32.xlu0 %v919, 96
  %v934 = vpop.permute.xlu0 %933
  %935 = vrot.lane.b32.xlu0 %v922, 96
  %v936 = vpop.permute.xlu0 %935
  %vm941 = vcmask 1048320
  %942 = vst.msk [vmem:[#allocation3] sm:$0xff] %vm941, %v930
  %943 = vst.msk [vmem:[#allocation3 + $0x10] sm:$0xff] %vm941, %v932
  %944 = vst.msk [vmem:[#allocation3 + $0x20] sm:$0xff] %vm941, %v934
  %945 = vst.msk [vmem:[#allocation3 + $0x30] sm:$0xff] %vm941, %v936
  %v946 = vpack.c.bf16 %v914, %v911
  %v947 = vpack.c.bf16 %v922, %v919
  %948 = vmatprep.subr.bf16.mxu0 0
  %949 = vmatpush1.bf16.msra.mxu0 0
  %950 = vmatprep.subr.bf16.mxu0 0
  %951 = vmatpush1.bf16.msra.mxu0 0
  %952 = vmatprep.subr.bf16.mxu0 0
  %953 = vmatpush1.bf16.msra.mxu0 0
  %954 = vmatprep.subr.bf16.mxu0 0
  %955 = vmatpush1.bf16.msra.mxu0 0
  %956 = vmatprep.subr.bf16.mxu0 0
  %957 = vmatpush1.bf16.msra.mxu0 0
  %958 = vmatprep.subr.bf16.mxu0 0
  %959 = vmatpush1.bf16.msra.mxu0 0
  %960 = vmatprep.subr.bf16.mxu0 0
  %961 = vmatpush1.bf16.msra.mxu0 %v947
  %962 = vmatprep.subr.bf16.mxu0 0
  %963 = vmatpush1.bf16.msra.mxu0 %v946
  %964 = vmatprep.subr.bf16.mxu0 0
  %965 = vmatpush2.bf16.msra.mxu0 0
  %966 = vmatprep.subr.bf16.mxu0 0
  %967 = vmatpush2.bf16.msra.mxu0 0
  %968 = vmatprep.subr.bf16.mxu0 0
  %969 = vmatpush2.bf16.msra.mxu0 0
  %970 = vmatprep.subr.bf16.mxu0 0
  %971 = vmatpush2.bf16.msra.mxu0 0
  %972 = vmatprep.subr.bf16.mxu0 0
  %973 = vmatpush2.bf16.msra.mxu0 0
  %974 = vmatprep.subr.bf16.mxu0 0
  %975 = vmatpush2.bf16.msra.mxu0 0
  %976 = vmatprep.subr.bf16.mxu0 0
  %977 = vmatpush2.bf16.msra.mxu0 0
  %978 = vmatprep.subr.bf16.mxu0 0
  %979 = vmatpush2.bf16.msra.mxu0 0
  %980 = vmatprep.mubr.bf16.mxu0 0
  %981 = vmatmul.mubr.bf16.gmra.mxu0 %v315
  %v982 = vpop.f32.mrf.mxu0
  %v983 = vadd.f32 0.0, %v982
  %v984 = vpop.f32.mrf.mxu0
  %v985 = vpop.f32.mrf.mxu0
  %v986 = vadd.f32 0.0, %v985
  %v987 = vpop.f32.mrf.mxu0
  %988 = vmatprep.mubr.bf16.mxu0 0
  %989 = vmatmul.mubr.bf16.gmra.mxu0 %v318
  %v990 = vpop.f32.mrf.mxu0
  %v991 = vadd.f32 0.0, %v990
  %v992 = vpop.f32.mrf.mxu0
  %v993 = vpop.f32.mrf.mxu0
  %v994 = vadd.f32 0.0, %v993
  %v995 = vpop.f32.mrf.mxu0
  %996 = vdwg.mxu0
  %v997 = vmul.f32 %v983, 2.0
  %v998 = vmul.f32 %v986, 2.0
  %v999 = vmul.f32 %v991, 2.0
  %v1000 = vmul.f32 %v994, 2.0
  %v1001 = vsub.f32 %v997, %v761
  %v1002 = vsub.f32 %v998, %v764
  %v1003 = vsub.f32 %v999, %v769
  %v1004 = vsub.f32 %v1000, %v772
  %1005 = vst.msk [vmem:[#allocation3 + $0x8] sm:$0xff] %vm143, %v1001
  %1006 = vst.msk [vmem:[#allocation3 + $0x18] sm:$0xff] %vm143, %v1002
  %1007 = vst.msk [vmem:[#allocation3 + $0x28] sm:$0xff] %vm143, %v1003
  %1008 = vst.msk [vmem:[#allocation3 + $0x38] sm:$0xff] %vm143, %v1004
  %v1009 = vld [vmem:[#allocation3] sm:$0xff]
  %v1010 = vld [vmem:[#allocation3 + $0x8] sm:$0xff]
  %v1011 = vld [vmem:[#allocation3 + $0x10] sm:$0xff]
  %v1012 = vld [vmem:[#allocation3 + $0x18] sm:$0xff]
  %v1013 = vld [vmem:[#allocation3 + $0x20] sm:$0xff]
  %v1014 = vld [vmem:[#allocation3 + $0x28] sm:$0xff]
  %v1015 = vld [vmem:[#allocation3 + $0x30] sm:$0xff]
  %v1016 = vld [vmem:[#allocation3 + $0x38] sm:$0xff]
  %v1017 = vpack.c.bf16 %v1011, %v1009
  %v1018 = vpack.c.bf16 %v1012, %v1010
  %v1019 = vpack.c.bf16 %v1015, %v1013
  %v1020 = vpack.c.bf16 %v1016, %v1014
  %v1041 = vunpack.c.l.b16 %v102
  %v1042 = vunpack.c.l.b16 %v103
  %v1043 = vunpack.c.l.b16 %v104
  %v1044 = vunpack.c.l.b16 %v105
  %v1045 = vunpack.c.l.b16 %v106
  %v1046 = vunpack.c.l.b16 %v107
  %v1047 = vunpack.c.l.b16 %v108
  %v1048 = vunpack.c.l.b16 %v109
  %v1049 = vunpack.c.l.b16 %v110
  %v1050 = vunpack.c.l.b16 %v111
  %v1051 = vunpack.c.l.b16 %v112
  %v1052 = vunpack.c.l.b16 %v113
  %v1053 = vunpack.c.l.b16 %v114
  %v1054 = vunpack.c.l.b16 %v115
  %v1055 = vunpack.c.l.b16 %v116
  %v1056 = vunpack.c.l.b16 %v117
  %v1057 = vunpack.c.l.b16 %v118
  %v1058 = vunpack.c.l.b16 %v119
  %v1059 = vunpack.c.l.b16 %v120
  %v1060 = vunpack.c.l.b16 %v121
  %v1061 = vpack.c.b16 %v1042, %v1041
  %v1062 = vpack.c.b16 %v1044, %v1043
  %v1063 = vpack.c.b16 %v1046, %v1045
  %v1064 = vpack.c.b16 %v1048, %v1047
  %v1065 = vpack.c.b16 %v1050, %v1049
  %v1066 = vpack.c.b16 %v1052, %v1051
  %v1067 = vpack.c.b16 %v1054, %v1053
  %v1068 = vpack.c.b16 %v1056, %v1055
  %v1069 = vpack.c.b16 %v1058, %v1057
  %v1070 = vpack.c.b16 %v1060, %v1059
  %1085 = vrot.lane.b32.xlu0 %v686, 64
  %v1086 = vpop.permute.xlu0 %1085
  %1087 = vrot.lane.b32.xlu0 %v689, 64
  %v1088 = vpop.permute.xlu0 %1087
  %1089 = vrot.lane.b32.xlu0 %v694, 64
  %v1090 = vpop.permute.xlu0 %1089
  %1091 = vrot.lane.b32.xlu0 %v697, 64
  %v1092 = vpop.permute.xlu0 %1091
  %v1098 = vsel %vm143, %v1018, 0
  %v1101 = vsel %vm143, %v1020, 0
  %1103 = vmatprep.subr.bf16.mxu0 0
  %1104 = vmatpush1.bf16.msra.mxu0 %v1068
  %1105 = vmatprep.subr.bf16.mxu0 0
  %1106 = vmatpush1.bf16.msra.mxu0 %v1067
  %1107 = vmatprep.subr.bf16.mxu0 0
  %1108 = vmatpush1.bf16.msra.mxu0 %v1066
  %1109 = vmatprep.subr.bf16.mxu0 0
  %1110 = vmatpush1.bf16.msra.mxu0 %v1065
  %1111 = vmatprep.subr.bf16.mxu0 0
  %1112 = vmatpush1.bf16.msra.mxu0 %v1064
  %1113 = vmatprep.subr.bf16.mxu0 0
  %1114 = vmatpush1.bf16.msra.mxu0 %v1063
  %1115 = vmatprep.subr.bf16.mxu0 0
  %1116 = vmatpush1.bf16.msra.mxu0 %v1062
  %1117 = vmatprep.subr.bf16.mxu0 0
  %1118 = vmatpush1.bf16.msra.mxu0 %v1061
  %1119 = vmatprep.subr.bf16.mxu0 0
  %1120 = vmatpush2.bf16.msra.mxu0 0
  %1121 = vmatprep.subr.bf16.mxu0 0
  %1122 = vmatpush2.bf16.msra.mxu0 0
  %1123 = vmatprep.subr.bf16.mxu0 0
  %1124 = vmatpush2.bf16.msra.mxu0 0
  %1125 = vmatprep.subr.bf16.mxu0 0
  %1126 = vmatpush2.bf16.msra.mxu0 0
  %1127 = vmatprep.subr.bf16.mxu0 0
  %1128 = vmatpush2.bf16.msra.mxu0 0
  %1129 = vmatprep.subr.bf16.mxu0 0
  %1130 = vmatpush2.bf16.msra.mxu0 0
  %1131 = vmatprep.subr.bf16.mxu0 0
  %1132 = vmatpush2.bf16.msra.mxu0 %v1070
  %1133 = vmatprep.subr.bf16.mxu0 0
  %1134 = vmatpush2.bf16.msra.mxu0 %v1069
  %1135 = vmatprep.mubr.bf16.mxu0 %v1098
  %1136 = vmatmul.mubr.bf16.gmra.mxu0 %v1017
  %v1137 = vpop.f32.mrf.mxu0
  %v1138 = vadd.f32 %v1086, %v1137
  %v1139 = vpop.f32.mrf.mxu0
  %v1140 = vpop.f32.mrf.mxu0
  %v1141 = vadd.f32 %v1088, %v1140
  %v1142 = vpop.f32.mrf.mxu0
  %1143 = vmatprep.mubr.bf16.mxu0 %v1101
  %1144 = vmatmul.mubr.bf16.gmra.mxu0 %v1019
  %v1145 = vpop.f32.mrf.mxu0
  %v1146 = vadd.f32 %v1090, %v1145
  %v1147 = vpop.f32.mrf.mxu0
  %v1148 = vpop.f32.mrf.mxu0
  %v1149 = vadd.f32 %v1092, %v1148
  %v1150 = vpop.f32.mrf.mxu0
  %1151 = vdwg.mxu0
  %v1153 = vlaneseq
  %v1154 = vshrl.u32 %v1153, 7
  %v1155 = vsub.s32 0, %v1154
  %v1156 = vrot.slane %v122, %v1155
  %v1158 = vadd.f32 %v1138, %v1156
  %v1159 = vadd.f32 %v1141, %v1156
  %v1160 = vadd.f32 %v1146, %v1156
  %v1161 = vadd.f32 %v1149, %v1156
  %v1162 = vtanh.pop %v1158
  %v1163 = vtanh.pop %v1159
  %v1164 = vtanh.pop %v1160
  %v1165 = vtanh.pop %v1161
  %v1166 = vmul.f32 %v712, %v132
  %v1167 = vmul.f32 %v713, %v134
  %v1168 = vmul.f32 %v714, %v136
  %v1169 = vmul.f32 %v715, %v138
  %v1170 = vsub.f32 1.0, %v712
  %v1171 = vsub.f32 1.0, %v713
  %v1172 = vsub.f32 1.0, %v714
  %v1173 = vsub.f32 1.0, %v715
  %1178 = vrot.lane.b32.xlu0 %v1162, 32
  %v1179 = vpop.permute.xlu0 %1178
  %1180 = vrot.lane.b32.xlu0 %v1163, 32
  %v1181 = vpop.permute.xlu0 %1180
  %1182 = vrot.lane.b32.xlu0 %v1164, 32
  %v1183 = vpop.permute.xlu0 %1182
  %1184 = vrot.lane.b32.xlu0 %v1165, 32
  %v1185 = vpop.permute.xlu0 %1184
  %v1190 = vmul.f32 %v1170, %v1179
  %v1191 = vmul.f32 %v1171, %v1181
  %v1192 = vmul.f32 %v1172, %v1183
  %v1193 = vmul.f32 %v1173, %v1185
  %v1194 = vadd.f32 %v1166, %v1190
  %v1195 = vadd.f32 %v1167, %v1191
  %v1196 = vadd.f32 %v1168, %v1192
  %v1197 = vadd.f32 %v1169, %v1193
  %1202 = vrot.lane.b32.xlu0 %v1194, 96
  %v1203 = vpop.permute.xlu0 %1202
  %1204 = vrot.lane.b32.xlu0 %v1195, 96
  %v1205 = vpop.permute.xlu0 %1204
  %1206 = vrot.lane.b32.xlu0 %v1196, 96
  %v1207 = vpop.permute.xlu0 %1206
  %1208 = vrot.lane.b32.xlu0 %v1197, 96
  %v1209 = vpop.permute.xlu0 %1208
  %1214 = vst.msk [vmem:[%s14] sm:$0xff] %vm143, %v1203
  %1215 = vst.msk [vmem:[%s14 + $0x8] sm:$0xff] %vm143, %v1205
  %1216 = vst.msk [vmem:[%s14 + $0x10] sm:$0xff] %vm143, %v1207
  %1217 = vst.msk [vmem:[%s14 + $0x18] sm:$0xff] %vm143, %v1209
  %v1218 = vld [vmem:[%s7] sm:$0xf]
  %v1219 = vld [vmem:[%s7 + $0x4] sm:$0xf]
  %v1220 = vld [vmem:[%s7 + $0x8] sm:$0xf]
  %v1221 = vld [vmem:[%s7 + $0xc] sm:$0xf]
  %v1222 = vld [vmem:[%s7 + $0x10] sm:$0xf]
  %v1223 = vld [vmem:[%s7 + $0x14] sm:$0xf]
  %v1224 = vld [vmem:[%s7 + $0x18] sm:$0xf]
  %v1225 = vld [vmem:[%s7 + $0x1c] sm:$0xf]
  %v1226 = vld [vmem:[%s7 + $0x20] sm:$0xf]
  %v1227 = vld [vmem:[%s7 + $0x24] sm:$0xf]
  %v1228 = vld [vmem:[%s7 + $0x28] sm:$0xf]
  %v1229 = vld [vmem:[%s7 + $0x2c] sm:$0xf]
  %v1230 = vld [vmem:[%s7 + $0x30] sm:$0xf]
  %v1231 = vld [vmem:[%s7 + $0x34] sm:$0xf]
  %v1232 = vld [vmem:[%s7 + $0x38] sm:$0xf]
  %v1233 = vld [vmem:[%s7 + $0x3c] sm:$0xf]
  %v1234 = vld [vmem:[%s7 + $0x40] sm:$0xf]
  %v1235 = vld [vmem:[%s7 + $0x44] sm:$0xf]
  %v1236 = vld [vmem:[%s7 + $0x48] sm:$0xf]
  %v1237 = vld [vmem:[%s7 + $0x4c] sm:$0xf]
  %v1238 = vld [vmem:[%s7 + $0x50] sm:$0xf]
  %v1239 = vld [vmem:[%s7 + $0x54] sm:$0xf]
  %v1240 = vld [vmem:[%s7 + $0x58] sm:$0xf]
  %v1241 = vld [vmem:[%s7 + $0x5c] sm:$0xf]
  %v1242 = vld [vmem:[%s7 + $0x60] sm:$0xf]
  %v1243 = vld [vmem:[%s7 + $0x64] sm:$0xf]
  %v1244 = vld [vmem:[%s7 + $0x68] sm:$0xf]
  %v1245 = vld [vmem:[%s7 + $0x6c] sm:$0xf]
  %v1246 = vld [vmem:[%s7 + $0x70] sm:$0xf]
  %v1247 = vld [vmem:[%s7 + $0x74] sm:$0xf]
  %v1248 = vld [vmem:[%s7 + $0x78] sm:$0xf]
  %v1249 = vld [vmem:[%s7 + $0x7c] sm:$0xf]
  %v1250 = vld [vmem:[%s7 + $0x80] sm:$0xf]
  %v1251 = vld [vmem:[%s7 + $0x84] sm:$0xf]
  %v1252 = vld [vmem:[%s7 + $0x88] sm:$0xf]
  %v1253 = vld [vmem:[%s7 + $0x8c] sm:$0xf]
  %v1254 = vld [vmem:[%s7 + $0x90] sm:$0xf]
  %v1255 = vld [vmem:[%s7 + $0x94] sm:$0xf]
  %v1256 = vld [vmem:[%s7 + $0x98] sm:$0xf]
  %v1257 = vld [vmem:[%s7 + $0x9c] sm:$0xf]
  %v1258 = vld [vmem:[%s8] sm:$0x1]
  %v1259 = vld [vmem:[%s9] sm:$0xf]
  %v1260 = vld [vmem:[%s9 + $0x4] sm:$0xf]
  %v1261 = vld [vmem:[%s9 + $0x8] sm:$0xf]
  %v1262 = vld [vmem:[%s9 + $0xc] sm:$0xf]
  %v1263 = vld [vmem:[%s9 + $0x10] sm:$0xf]
  %v1264 = vld [vmem:[%s9 + $0x14] sm:$0xf]
  %v1265 = vld [vmem:[%s9 + $0x18] sm:$0xf]
  %v1266 = vld [vmem:[%s9 + $0x1c] sm:$0xf]
  %v1267 = vld [vmem:[%s9 + $0x20] sm:$0xf]
  %v1268 = vld [vmem:[%s9 + $0x24] sm:$0xf]
  %v1269 = vld [vmem:[%s9 + $0x28] sm:$0xf]
  %v1270 = vld [vmem:[%s9 + $0x2c] sm:$0xf]
  %v1271 = vld [vmem:[%s9 + $0x30] sm:$0xf]
  %v1272 = vld [vmem:[%s9 + $0x34] sm:$0xf]
  %v1273 = vld [vmem:[%s9 + $0x38] sm:$0xf]
  %v1274 = vld [vmem:[%s9 + $0x3c] sm:$0xf]
  %v1275 = vld [vmem:[%s9 + $0x40] sm:$0xf]
  %v1276 = vld [vmem:[%s9 + $0x44] sm:$0xf]
  %v1277 = vld [vmem:[%s9 + $0x48] sm:$0xf]
  %v1278 = vld [vmem:[%s9 + $0x4c] sm:$0xf]
  %v1279 = vld [vmem:[%s10] sm:$0x1]
  %s1280 = scalar_lea.vmem %s1, 32
  %v1281 = vld [vmem:[%s1280] sm:$0xff]
  %v1282 = vld [vmem:[%s1280 + $0x8] sm:$0xff]
  %v1283 = vld [vmem:[%s1280 + $0x10] sm:$0xff]
  %v1284 = vld [vmem:[%s1280 + $0x18] sm:$0xff]
  %1289 = vrot.lane.b32.xlu0 %v1281, 32
  %v1290 = vpop.permute.xlu0 %1289
  %1291 = vrot.lane.b32.xlu0 %v1282, 32
  %v1292 = vpop.permute.xlu0 %1291
  %1293 = vrot.lane.b32.xlu0 %v1283, 32
  %v1294 = vpop.permute.xlu0 %1293
  %1295 = vrot.lane.b32.xlu0 %v1284, 32
  %v1296 = vpop.permute.xlu0 %1295
  %v1301 = vsel %vm143, %v1203, %v1290
  %v1302 = vsel %vm143, %v1205, %v1292
  %v1303 = vsel %vm143, %v1207, %v1294
  %v1304 = vsel %vm143, %v1209, %v1296
  %1305 = vst.msk [vmem:[#allocation2] sm:$0xff] %vm148, %v1301
  %1306 = vst.msk [vmem:[#allocation2 + $0x18] sm:$0xff] %vm148, %v1302
  %1307 = vst.msk [vmem:[#allocation2 + $0x30] sm:$0xff] %vm148, %v1303
  %1308 = vst.msk [vmem:[#allocation2 + $0x48] sm:$0xff] %vm148, %v1304
  %v1309 = vpack.c.bf16 %v1302, %v1301
  %v1310 = vpack.c.bf16 %v1304, %v1303
  %1311 = vmatprep.subr.bf16.mxu0 0
  %1312 = vmatpush1.bf16.msra.mxu0 0
  %1313 = vmatprep.subr.bf16.mxu0 0
  %1314 = vmatpush1.bf16.msra.mxu0 0
  %1315 = vmatprep.subr.bf16.mxu0 0
  %1316 = vmatpush1.bf16.msra.mxu0 0
  %1317 = vmatprep.subr.bf16.mxu0 0
  %1318 = vmatpush1.bf16.msra.mxu0 0
  %1319 = vmatprep.subr.bf16.mxu0 0
  %1320 = vmatpush1.bf16.msra.mxu0 0
  %1321 = vmatprep.subr.bf16.mxu0 0
  %1322 = vmatpush1.bf16.msra.mxu0 0
  %1323 = vmatprep.subr.bf16.mxu0 0
  %1324 = vmatpush1.bf16.msra.mxu0 %v1310
  %1325 = vmatprep.subr.bf16.mxu0 0
  %1326 = vmatpush1.bf16.msra.mxu0 %v1309
  %1327 = vmatprep.subr.bf16.mxu0 0
  %1328 = vmatpush2.bf16.msra.mxu0 0
  %1329 = vmatprep.subr.bf16.mxu0 0
  %1330 = vmatpush2.bf16.msra.mxu0 0
  %1331 = vmatprep.subr.bf16.mxu0 0
  %1332 = vmatpush2.bf16.msra.mxu0 0
  %1333 = vmatprep.subr.bf16.mxu0 0
  %1334 = vmatpush2.bf16.msra.mxu0 0
  %1335 = vmatprep.subr.bf16.mxu0 0
  %1336 = vmatpush2.bf16.msra.mxu0 0
  %1337 = vmatprep.subr.bf16.mxu0 0
  %1338 = vmatpush2.bf16.msra.mxu0 0
  %1339 = vmatprep.subr.bf16.mxu0 0
  %1340 = vmatpush2.bf16.msra.mxu0 0
  %1341 = vmatprep.subr.bf16.mxu0 0
  %1342 = vmatpush2.bf16.msra.mxu0 0
  %1343 = vmatprep.mubr.bf16.mxu0 0
  %1344 = vmatmul.mubr.bf16.gmra.mxu0 %v166
  %v1345 = vpop.f32.mrf.mxu0
  %v1346 = vadd.f32 0.0, %v1345
  %v1347 = vpop.f32.mrf.mxu0
  %v1348 = vpop.f32.mrf.mxu0
  %v1349 = vadd.f32 0.0, %v1348
  %v1350 = vpop.f32.mrf.mxu0
  %1351 = vmatprep.mubr.bf16.mxu0 0
  %1352 = vmatmul.mubr.bf16.gmra.mxu0 %v169
  %v1353 = vpop.f32.mrf.mxu0
  %v1354 = vadd.f32 0.0, %v1353
  %v1355 = vpop.f32.mrf.mxu0
  %v1356 = vpop.f32.mrf.mxu0
  %v1357 = vadd.f32 0.0, %v1356
  %v1358 = vpop.f32.mrf.mxu0
  %1359 = vdwg.mxu0
  %1364 = vrot.lane.b32.xlu0 %v1346, 64
  %v1365 = vpop.permute.xlu0 %1364
  %1366 = vrot.lane.b32.xlu0 %v1349, 64
  %v1367 = vpop.permute.xlu0 %1366
  %1368 = vrot.lane.b32.xlu0 %v1354, 64
  %v1369 = vpop.permute.xlu0 %1368
  %1370 = vrot.lane.b32.xlu0 %v1357, 64
  %v1371 = vpop.permute.xlu0 %1370
  %1376 = vst.msk [vmem:[#allocation2] sm:$0xff] %vm236, %v1365
  %1377 = vst.msk [vmem:[#allocation2 + $0x18] sm:$0xff] %vm236, %v1367
  %1378 = vst.msk [vmem:[#allocation2 + $0x30] sm:$0xff] %vm236, %v1369
  %1379 = vst.msk [vmem:[#allocation2 + $0x48] sm:$0xff] %vm236, %v1371
  %v1380 = vpack.c.bf16 %v1349, %v1346
  %v1381 = vpack.c.bf16 %v1357, %v1354
  %1382 = vmatprep.subr.bf16.mxu0 0
  %1383 = vmatpush1.bf16.msra.mxu0 0
  %1384 = vmatprep.subr.bf16.mxu0 0
  %1385 = vmatpush1.bf16.msra.mxu0 0
  %1386 = vmatprep.subr.bf16.mxu0 0
  %1387 = vmatpush1.bf16.msra.mxu0 0
  %1388 = vmatprep.subr.bf16.mxu0 0
  %1389 = vmatpush1.bf16.msra.mxu0 0
  %1390 = vmatprep.subr.bf16.mxu0 0
  %1391 = vmatpush1.bf16.msra.mxu0 0
  %1392 = vmatprep.subr.bf16.mxu0 0
  %1393 = vmatpush1.bf16.msra.mxu0 0
  %1394 = vmatprep.subr.bf16.mxu0 0
  %1395 = vmatpush1.bf16.msra.mxu0 %v1381
  %1396 = vmatprep.subr.bf16.mxu0 0
  %1397 = vmatpush1.bf16.msra.mxu0 %v1380
  %1398 = vmatprep.subr.bf16.mxu0 0
  %1399 = vmatpush2.bf16.msra.mxu0 0
  %1400 = vmatprep.subr.bf16.mxu0 0
  %1401 = vmatpush2.bf16.msra.mxu0 0
  %1402 = vmatprep.subr.bf16.mxu0 0
  %1403 = vmatpush2.bf16.msra.mxu0 0
  %1404 = vmatprep.subr.bf16.mxu0 0
  %1405 = vmatpush2.bf16.msra.mxu0 0
  %1406 = vmatprep.subr.bf16.mxu0 0
  %1407 = vmatpush2.bf16.msra.mxu0 0
  %1408 = vmatprep.subr.bf16.mxu0 0
  %1409 = vmatpush2.bf16.msra.mxu0 0
  %1410 = vmatprep.subr.bf16.mxu0 0
  %1411 = vmatpush2.bf16.msra.mxu0 0
  %1412 = vmatprep.subr.bf16.mxu0 0
  %1413 = vmatpush2.bf16.msra.mxu0 0
  %1414 = vmatprep.mubr.bf16.mxu0 0
  %1415 = vmatmul.mubr.bf16.gmra.mxu0 %v166
  %v1416 = vpop.f32.mrf.mxu0
  %v1417 = vadd.f32 0.0, %v1416
  %v1418 = vpop.f32.mrf.mxu0
  %v1419 = vpop.f32.mrf.mxu0
  %v1420 = vadd.f32 0.0, %v1419
  %v1421 = vpop.f32.mrf.mxu0
  %1422 = vmatprep.mubr.bf16.mxu0 0
  %1423 = vmatmul.mubr.bf16.gmra.mxu0 %v169
  %v1424 = vpop.f32.mrf.mxu0
  %v1425 = vadd.f32 0.0, %v1424
  %v1426 = vpop.f32.mrf.mxu0
  %v1427 = vpop.f32.mrf.mxu0
  %v1428 = vadd.f32 0.0, %v1427
  %v1429 = vpop.f32.mrf.mxu0
  %1430 = vdwg.mxu0
  %v1431 = vmul.f32 %v1417, 2.0
  %v1432 = vmul.f32 %v1420, 2.0
  %v1433 = vmul.f32 %v1425, 2.0
  %v1434 = vmul.f32 %v1428, 2.0
  %v1435 = vsub.f32 %v1431, %v1301
  %v1436 = vsub.f32 %v1432, %v1302
  %v1437 = vsub.f32 %v1433, %v1303
  %v1438 = vsub.f32 %v1434, %v1304
  %1439 = vst.msk [vmem:[#allocation2 + $0x8] sm:$0xff] %vm148, %v1435
  %1440 = vst.msk [vmem:[#allocation2 + $0x20] sm:$0xff] %vm148, %v1436
  %1441 = vst.msk [vmem:[#allocation2 + $0x38] sm:$0xff] %vm148, %v1437
  %1442 = vst.msk [vmem:[#allocation2 + $0x50] sm:$0xff] %vm148, %v1438
  %1443 = vmatprep.subr.bf16.mxu0 0
  %1444 = vmatpush1.bf16.msra.mxu0 0
  %1445 = vmatprep.subr.bf16.mxu0 0
  %1446 = vmatpush1.bf16.msra.mxu0 0
  %1447 = vmatprep.subr.bf16.mxu0 0
  %1448 = vmatpush1.bf16.msra.mxu0 0
  %1449 = vmatprep.subr.bf16.mxu0 0
  %1450 = vmatpush1.bf16.msra.mxu0 0
  %1451 = vmatprep.subr.bf16.mxu0 0
  %1452 = vmatpush1.bf16.msra.mxu0 0
  %1453 = vmatprep.subr.bf16.mxu0 0
  %1454 = vmatpush1.bf16.msra.mxu0 0
  %1455 = vmatprep.subr.bf16.mxu0 0
  %1456 = vmatpush1.bf16.msra.mxu0 %v1381
  %1457 = vmatprep.subr.bf16.mxu0 0
  %1458 = vmatpush1.bf16.msra.mxu0 %v1380
  %1459 = vmatprep.subr.bf16.mxu0 0
  %1460 = vmatpush2.bf16.msra.mxu0 0
  %1461 = vmatprep.subr.bf16.mxu0 0
  %1462 = vmatpush2.bf16.msra.mxu0 0
  %1463 = vmatprep.subr.bf16.mxu0 0
  %1464 = vmatpush2.bf16.msra.mxu0 0
  %1465 = vmatprep.subr.bf16.mxu0 0
  %1466 = vmatpush2.bf16.msra.mxu0 0
  %1467 = vmatprep.subr.bf16.mxu0 0
  %1468 = vmatpush2.bf16.msra.mxu0 0
  %1469 = vmatprep.subr.bf16.mxu0 0
  %1470 = vmatpush2.bf16.msra.mxu0 0
  %1471 = vmatprep.subr.bf16.mxu0 0
  %1472 = vmatpush2.bf16.msra.mxu0 0
  %1473 = vmatprep.subr.bf16.mxu0 0
  %1474 = vmatpush2.bf16.msra.mxu0 0
  %1475 = vmatprep.mubr.bf16.mxu0 0
  %1476 = vmatmul.mubr.bf16.gmra.mxu0 %v315
  %v1477 = vpop.f32.mrf.mxu0
  %v1478 = vadd.f32 0.0, %v1477
  %v1479 = vpop.f32.mrf.mxu0
  %v1480 = vpop.f32.mrf.mxu0
  %v1481 = vadd.f32 0.0, %v1480
  %v1482 = vpop.f32.mrf.mxu0
  %1483 = vmatprep.mubr.bf16.mxu0 0
  %1484 = vmatmul.mubr.bf16.gmra.mxu0 %v318
  %v1485 = vpop.f32.mrf.mxu0
  %v1486 = vadd.f32 0.0, %v1485
  %v1487 = vpop.f32.mrf.mxu0
  %v1488 = vpop.f32.mrf.mxu0
  %v1489 = vadd.f32 0.0, %v1488
  %v1490 = vpop.f32.mrf.mxu0
  %1491 = vdwg.mxu0
  %1496 = vrot.lane.b32.xlu0 %v1478, 64
  %v1497 = vpop.permute.xlu0 %1496
  %1498 = vrot.lane.b32.xlu0 %v1481, 64
  %v1499 = vpop.permute.xlu0 %1498
  %1500 = vrot.lane.b32.xlu0 %v1486, 64
  %v1501 = vpop.permute.xlu0 %1500
  %1502 = vrot.lane.b32.xlu0 %v1489, 64
  %v1503 = vpop.permute.xlu0 %1502
  %1508 = vst.msk [vmem:[#allocation2 + $0x8] sm:$0xff] %vm236, %v1497
  %1509 = vst.msk [vmem:[#allocation2 + $0x20] sm:$0xff] %vm236, %v1499
  %1510 = vst.msk [vmem:[#allocation2 + $0x38] sm:$0xff] %vm236, %v1501
  %1511 = vst.msk [vmem:[#allocation2 + $0x50] sm:$0xff] %vm236, %v1503
  %v1512 = vpack.c.bf16 %v1481, %v1478
  %v1513 = vpack.c.bf16 %v1489, %v1486
  %1514 = vmatprep.subr.bf16.mxu0 0
  %1515 = vmatpush1.bf16.msra.mxu0 0
  %1516 = vmatprep.subr.bf16.mxu0 0
  %1517 = vmatpush1.bf16.msra.mxu0 0
  %1518 = vmatprep.subr.bf16.mxu0 0
  %1519 = vmatpush1.bf16.msra.mxu0 0
  %1520 = vmatprep.subr.bf16.mxu0 0
  %1521 = vmatpush1.bf16.msra.mxu0 0
  %1522 = vmatprep.subr.bf16.mxu0 0
  %1523 = vmatpush1.bf16.msra.mxu0 0
  %1524 = vmatprep.subr.bf16.mxu0 0
  %1525 = vmatpush1.bf16.msra.mxu0 0
  %1526 = vmatprep.subr.bf16.mxu0 0
  %1527 = vmatpush1.bf16.msra.mxu0 %v1513
  %1528 = vmatprep.subr.bf16.mxu0 0
  %1529 = vmatpush1.bf16.msra.mxu0 %v1512
  %1530 = vmatprep.subr.bf16.mxu0 0
  %1531 = vmatpush2.bf16.msra.mxu0 0
  %1532 = vmatprep.subr.bf16.mxu0 0
  %1533 = vmatpush2.bf16.msra.mxu0 0
  %1534 = vmatprep.subr.bf16.mxu0 0
  %1535 = vmatpush2.bf16.msra.mxu0 0
  %1536 = vmatprep.subr.bf16.mxu0 0
  %1537 = vmatpush2.bf16.msra.mxu0 0
  %1538 = vmatprep.subr.bf16.mxu0 0
  %1539 = vmatpush2.bf16.msra.mxu0 0
  %1540 = vmatprep.subr.bf16.mxu0 0
  %1541 = vmatpush2.bf16.msra.mxu0 0
  %1542 = vmatprep.subr.bf16.mxu0 0
  %1543 = vmatpush2.bf16.msra.mxu0 0
  %1544 = vmatprep.subr.bf16.mxu0 0
  %1545 = vmatpush2.bf16.msra.mxu0 0
  %1546 = vmatprep.mubr.bf16.mxu0 0
  %1547 = vmatmul.mubr.bf16.gmra.mxu0 %v315
  %v1548 = vpop.f32.mrf.mxu0
  %v1549 = vadd.f32 0.0, %v1548
  %v1550 = vpop.f32.mrf.mxu0
  %v1551 = vpop.f32.mrf.mxu0
  %v1552 = vadd.f32 0.0, %v1551
  %v1553 = vpop.f32.mrf.mxu0
  %1554 = vmatprep.mubr.bf16.mxu0 0
  %1555 = vmatmul.mubr.bf16.gmra.mxu0 %v318
  %v1556 = vpop.f32.mrf.mxu0
  %v1557 = vadd.f32 0.0, %v1556
  %v1558 = vpop.f32.mrf.mxu0
  %v1559 = vpop.f32.mrf.mxu0
  %v1560 = vadd.f32 0.0, %v1559
  %v1561 = vpop.f32.mrf.mxu0
  %1562 = vdwg.mxu0
  %v1563 = vmul.f32 %v1549, 2.0
  %v1564 = vmul.f32 %v1552, 2.0
  %v1565 = vmul.f32 %v1557, 2.0
  %v1566 = vmul.f32 %v1560, 2.0
  %v1567 = vsub.f32 %v1563, %v1346
  %v1568 = vsub.f32 %v1564, %v1349
  %v1569 = vsub.f32 %v1565, %v1354
  %v1570 = vsub.f32 %v1566, %v1357
  %1571 = vst.msk [vmem:[#allocation2 + $0x10] sm:$0xff] %vm148, %v1567
  %1572 = vst.msk [vmem:[#allocation2 + $0x28] sm:$0xff] %vm148, %v1568
  %1573 = vst.msk [vmem:[#allocation2 + $0x40] sm:$0xff] %vm148, %v1569
  %1574 = vst.msk [vmem:[#allocation2 + $0x58] sm:$0xff] %vm148, %v1570
  %v1575 = vld [vmem:[#allocation2] sm:$0xff]
  %v1576 = vld [vmem:[#allocation2 + $0x8] sm:$0xff]
  %v1577 = vld [vmem:[#allocation2 + $0x10] sm:$0xff]
  %v1578 = vld [vmem:[#allocation2 + $0x18] sm:$0xff]
  %v1579 = vld [vmem:[#allocation2 + $0x20] sm:$0xff]
  %v1580 = vld [vmem:[#allocation2 + $0x28] sm:$0xff]
  %v1581 = vld [vmem:[#allocation2 + $0x30] sm:$0xff]
  %v1582 = vld [vmem:[#allocation2 + $0x38] sm:$0xff]
  %v1583 = vld [vmem:[#allocation2 + $0x40] sm:$0xff]
  %v1584 = vld [vmem:[#allocation2 + $0x48] sm:$0xff]
  %v1585 = vld [vmem:[#allocation2 + $0x50] sm:$0xff]
  %v1586 = vld [vmem:[#allocation2 + $0x58] sm:$0xff]
  %v1587 = vpack.c.bf16 %v1578, %v1575
  %v1588 = vpack.c.bf16 %v1579, %v1576
  %v1589 = vpack.c.bf16 %v1580, %v1577
  %v1590 = vpack.c.bf16 %v1584, %v1581
  %v1591 = vpack.c.bf16 %v1585, %v1582
  %v1592 = vpack.c.bf16 %v1586, %v1583
  %v1594 = vlaneseq
  %v1595 = vshrl.u32 %v1594, 7
  %v1596 = vsub.s32 0, %v1595
  %v1597 = vrot.slane %v1258, %v1596
  %v1639 = vunpack.c.l.b16 %v1218
  %v1640 = vunpack.c.l.b16 %v1219
  %v1641 = vunpack.c.l.b16 %v1220
  %v1642 = vunpack.c.l.b16 %v1221
  %v1643 = vunpack.c.l.b16 %v1222
  %v1644 = vunpack.c.l.b16 %v1223
  %v1645 = vunpack.c.l.b16 %v1224
  %v1646 = vunpack.c.l.b16 %v1225
  %v1647 = vunpack.c.l.b16 %v1226
  %v1648 = vunpack.c.l.b16 %v1227
  %v1649 = vunpack.c.l.b16 %v1228
  %v1650 = vunpack.c.l.b16 %v1229
  %v1651 = vunpack.c.l.b16 %v1230
  %v1652 = vunpack.c.l.b16 %v1231
  %v1653 = vunpack.c.l.b16 %v1232
  %v1654 = vunpack.c.l.b16 %v1233
  %v1655 = vunpack.c.l.b16 %v1234
  %v1656 = vunpack.c.l.b16 %v1235
  %v1657 = vunpack.c.l.b16 %v1236
  %v1658 = vunpack.c.l.b16 %v1237
  %v1659 = vunpack.c.l.b16 %v1238
  %v1660 = vunpack.c.l.b16 %v1239
  %v1661 = vunpack.c.l.b16 %v1240
  %v1662 = vunpack.c.l.b16 %v1241
  %v1663 = vunpack.c.l.b16 %v1242
  %v1664 = vunpack.c.l.b16 %v1243
  %v1665 = vunpack.c.l.b16 %v1244
  %v1666 = vunpack.c.l.b16 %v1245
  %v1667 = vunpack.c.l.b16 %v1246
  %v1668 = vunpack.c.l.b16 %v1247
  %v1669 = vunpack.c.l.b16 %v1248
  %v1670 = vunpack.c.l.b16 %v1249
  %v1671 = vunpack.c.l.b16 %v1250
  %v1672 = vunpack.c.l.b16 %v1251
  %v1673 = vunpack.c.l.b16 %v1252
  %v1674 = vunpack.c.l.b16 %v1253
  %v1675 = vunpack.c.l.b16 %v1254
  %v1676 = vunpack.c.l.b16 %v1255
  %v1677 = vunpack.c.l.b16 %v1256
  %v1678 = vunpack.c.l.b16 %v1257
  %v1679 = vpack.c.b16 %v1640, %v1639
  %v1680 = vpack.c.b16 %v1642, %v1641
  %v1681 = vpack.c.b16 %v1644, %v1643
  %v1682 = vpack.c.b16 %v1646, %v1645
  %v1683 = vpack.c.b16 %v1648, %v1647
  %v1684 = vpack.c.b16 %v1650, %v1649
  %v1685 = vpack.c.b16 %v1652, %v1651
  %v1686 = vpack.c.b16 %v1654, %v1653
  %v1687 = vpack.c.b16 %v1656, %v1655
  %v1688 = vpack.c.b16 %v1658, %v1657
  %v1689 = vpack.c.b16 %v1660, %v1659
  %v1690 = vpack.c.b16 %v1662, %v1661
  %v1691 = vpack.c.b16 %v1664, %v1663
  %v1692 = vpack.c.b16 %v1666, %v1665
  %v1693 = vpack.c.b16 %v1668, %v1667
  %v1694 = vpack.c.b16 %v1670, %v1669
  %v1695 = vpack.c.b16 %v1672, %v1671
  %v1696 = vpack.c.b16 %v1674, %v1673
  %v1697 = vpack.c.b16 %v1676, %v1675
  %v1698 = vpack.c.b16 %v1678, %v1677
  %v1720 = vsel %vm148, %v1589, 0
  %v1723 = vsel %vm148, %v1592, 0
  %1725 = vmatprep.subr.bf16.mxu0 0
  %1726 = vmatpush1.bf16.msra.mxu0 %v1686
  %1727 = vmatprep.subr.bf16.mxu0 0
  %1728 = vmatpush1.bf16.msra.mxu0 %v1685
  %1729 = vmatprep.subr.bf16.mxu0 0
  %1730 = vmatpush1.bf16.msra.mxu0 %v1684
  %1731 = vmatprep.subr.bf16.mxu0 0
  %1732 = vmatpush1.bf16.msra.mxu0 %v1683
  %1733 = vmatprep.subr.bf16.mxu0 0
  %1734 = vmatpush1.bf16.msra.mxu0 %v1682
  %1735 = vmatprep.subr.bf16.mxu0 0
  %1736 = vmatpush1.bf16.msra.mxu0 %v1681
  %1737 = vmatprep.subr.bf16.mxu0 0
  %1738 = vmatpush1.bf16.msra.mxu0 %v1680
  %1739 = vmatprep.subr.bf16.mxu0 0
  %1740 = vmatpush1.bf16.msra.mxu0 %v1679
  %1741 = vmatprep.subr.bf16.mxu0 0
  %1742 = vmatpush2.bf16.msra.mxu0 %v1694
  %1743 = vmatprep.subr.bf16.mxu0 0
  %1744 = vmatpush2.bf16.msra.mxu0 %v1693
  %1745 = vmatprep.subr.bf16.mxu0 0
  %1746 = vmatpush2.bf16.msra.mxu0 %v1692
  %1747 = vmatprep.subr.bf16.mxu0 0
  %1748 = vmatpush2.bf16.msra.mxu0 %v1691
  %1749 = vmatprep.subr.bf16.mxu0 0
  %1750 = vmatpush2.bf16.msra.mxu0 %v1690
  %1751 = vmatprep.subr.bf16.mxu0 0
  %1752 = vmatpush2.bf16.msra.mxu0 %v1689
  %1753 = vmatprep.subr.bf16.mxu0 0
  %1754 = vmatpush2.bf16.msra.mxu0 %v1688
  %1755 = vmatprep.subr.bf16.mxu0 0
  %1756 = vmatpush2.bf16.msra.mxu0 %v1687
  %1757 = vmatprep.mubr.bf16.mxu0 %v1588
  %1758 = vmatmul.mubr.bf16.gmra.mxu0 %v1587
  %v1759 = vpop.f32.mrf.mxu0
  %v1760 = vadd.f32 %v1597, %v1759
  %v1761 = vpop.f32.mrf.mxu0
  %v1762 = vpop.f32.mrf.mxu0
  %v1763 = vadd.f32 %v1597, %v1762
  %v1764 = vpop.f32.mrf.mxu0
  %1765 = vmatprep.mubr.bf16.mxu0 %v1591
  %1766 = vmatmul.mubr.bf16.gmra.mxu0 %v1590
  %v1767 = vpop.f32.mrf.mxu0
  %v1768 = vadd.f32 %v1597, %v1767
  %v1769 = vpop.f32.mrf.mxu0
  %v1770 = vpop.f32.mrf.mxu0
  %v1771 = vadd.f32 %v1597, %v1770
  %v1772 = vpop.f32.mrf.mxu0
  %1773 = vdwg.mxu0
  %1774 = vmatprep.subr.bf16.mxu0 0
  %1775 = vmatpush1.bf16.msra.mxu0 0
  %1776 = vmatprep.subr.bf16.mxu0 0
  %1777 = vmatpush1.bf16.msra.mxu0 0
  %1778 = vmatprep.subr.bf16.mxu0 0
  %1779 = vmatpush1.bf16.msra.mxu0 0
  %1780 = vmatprep.subr.bf16.mxu0 0
  %1781 = vmatpush1.bf16.msra.mxu0 0
  %1782 = vmatprep.subr.bf16.mxu0 0
  %1783 = vmatpush1.bf16.msra.mxu0 %v1698
  %1784 = vmatprep.subr.bf16.mxu0 0
  %1785 = vmatpush1.bf16.msra.mxu0 %v1697
  %1786 = vmatprep.subr.bf16.mxu0 0
  %1787 = vmatpush1.bf16.msra.mxu0 %v1696
  %1788 = vmatprep.subr.bf16.mxu0 0
  %1789 = vmatpush1.bf16.msra.mxu0 %v1695
  %1790 = vmatprep.subr.bf16.mxu0 0
  %1791 = vmatpush2.bf16.msra.mxu0 0
  %1792 = vmatprep.subr.bf16.mxu0 0
  %1793 = vmatpush2.bf16.msra.mxu0 0
  %1794 = vmatprep.subr.bf16.mxu0 0
  %1795 = vmatpush2.bf16.msra.mxu0 0
  %1796 = vmatprep.subr.bf16.mxu0 0
  %1797 = vmatpush2.bf16.msra.mxu0 0
  %1798 = vmatprep.subr.bf16.mxu0 0
  %1799 = vmatpush2.bf16.msra.mxu0 0
  %1800 = vmatprep.subr.bf16.mxu0 0
  %1801 = vmatpush2.bf16.msra.mxu0 0
  %1802 = vmatprep.subr.bf16.mxu0 0
  %1803 = vmatpush2.bf16.msra.mxu0 0
  %1804 = vmatprep.subr.bf16.mxu0 0
  %1805 = vmatpush2.bf16.msra.mxu0 0
  %1806 = vmatprep.mubr.bf16.mxu0 0
  %1807 = vmatmul.mubr.bf16.gmra.mxu0 %v1720
  %v1808 = vpop.f32.mrf.mxu0
  %v1809 = vadd.f32 %v1760, %v1808
  %v1810 = vpop.f32.mrf.mxu0
  %v1811 = vpop.f32.mrf.mxu0
  %v1812 = vadd.f32 %v1763, %v1811
  %v1813 = vpop.f32.mrf.mxu0
  %1814 = vmatprep.mubr.bf16.mxu0 0
  %1815 = vmatmul.mubr.bf16.gmra.mxu0 %v1723
  %v1816 = vpop.f32.mrf.mxu0
  %v1817 = vadd.f32 %v1768, %v1816
  %v1818 = vpop.f32.mrf.mxu0
  %v1819 = vpop.f32.mrf.mxu0
  %v1820 = vadd.f32 %v1771, %v1819
  %v1821 = vpop.f32.mrf.mxu0
  %1822 = vdwg.mxu0
  %v1823 = vmul.f32 %v1809, 0.5
  %v1824 = vmul.f32 %v1812, 0.5
  %v1825 = vmul.f32 %v1817, 0.5
  %v1826 = vmul.f32 %v1820, 0.5
  %v1827 = vtanh.pop %v1823
  %v1828 = vtanh.pop %v1824
  %v1829 = vtanh.pop %v1825
  %v1830 = vtanh.pop %v1826
  %v1831 = vadd.f32 %v1827, 1.0
  %v1832 = vadd.f32 %v1828, 1.0
  %v1833 = vadd.f32 %v1829, 1.0
  %v1834 = vadd.f32 %v1830, 1.0
  %v1835 = vmul.f32 %v1831, 0.5
  %v1836 = vmul.f32 %v1832, 0.5
  %v1837 = vmul.f32 %v1833, 0.5
  %v1838 = vmul.f32 %v1834, 0.5
  %v1839 = vmul.f32 %v1835, %v1281
  %v1840 = vmul.f32 %v1836, %v1282
  %v1841 = vmul.f32 %v1837, %v1283
  %v1842 = vmul.f32 %v1838, %v1284
  %1843 = vst.msk [vmem:[#allocation3] sm:$0xff] %vm143, %v1839
  %1844 = vst.msk [vmem:[#allocation3 + $0x10] sm:$0xff] %vm143, %v1840
  %1845 = vst.msk [vmem:[#allocation3 + $0x20] sm:$0xff] %vm143, %v1841
  %1846 = vst.msk [vmem:[#allocation3 + $0x30] sm:$0xff] %vm143, %v1842
  %v1847 = vpack.c.bf16 %v1840, %v1839
  %v1848 = vpack.c.bf16 %v1842, %v1841
  %1849 = vmatprep.subr.bf16.mxu0 0
  %1850 = vmatpush1.bf16.msra.mxu0 0
  %1851 = vmatprep.subr.bf16.mxu0 0
  %1852 = vmatpush1.bf16.msra.mxu0 0
  %1853 = vmatprep.subr.bf16.mxu0 0
  %1854 = vmatpush1.bf16.msra.mxu0 0
  %1855 = vmatprep.subr.bf16.mxu0 0
  %1856 = vmatpush1.bf16.msra.mxu0 0
  %1857 = vmatprep.subr.bf16.mxu0 0
  %1858 = vmatpush1.bf16.msra.mxu0 0
  %1859 = vmatprep.subr.bf16.mxu0 0
  %1860 = vmatpush1.bf16.msra.mxu0 0
  %1861 = vmatprep.subr.bf16.mxu0 0
  %1862 = vmatpush1.bf16.msra.mxu0 %v1848
  %1863 = vmatprep.subr.bf16.mxu0 0
  %1864 = vmatpush1.bf16.msra.mxu0 %v1847
  %1865 = vmatprep.subr.bf16.mxu0 0
  %1866 = vmatpush2.bf16.msra.mxu0 0
  %1867 = vmatprep.subr.bf16.mxu0 0
  %1868 = vmatpush2.bf16.msra.mxu0 0
  %1869 = vmatprep.subr.bf16.mxu0 0
  %1870 = vmatpush2.bf16.msra.mxu0 0
  %1871 = vmatprep.subr.bf16.mxu0 0
  %1872 = vmatpush2.bf16.msra.mxu0 0
  %1873 = vmatprep.subr.bf16.mxu0 0
  %1874 = vmatpush2.bf16.msra.mxu0 0
  %1875 = vmatprep.subr.bf16.mxu0 0
  %1876 = vmatpush2.bf16.msra.mxu0 0
  %1877 = vmatprep.subr.bf16.mxu0 0
  %1878 = vmatpush2.bf16.msra.mxu0 0
  %1879 = vmatprep.subr.bf16.mxu0 0
  %1880 = vmatpush2.bf16.msra.mxu0 0
  %1881 = vmatprep.mubr.bf16.mxu0 0
  %1882 = vmatmul.mubr.bf16.gmra.mxu0 %v166
  %v1883 = vpop.f32.mrf.mxu0
  %v1884 = vadd.f32 0.0, %v1883
  %v1885 = vpop.f32.mrf.mxu0
  %v1886 = vpop.f32.mrf.mxu0
  %v1887 = vadd.f32 0.0, %v1886
  %v1888 = vpop.f32.mrf.mxu0
  %1889 = vmatprep.mubr.bf16.mxu0 0
  %1890 = vmatmul.mubr.bf16.gmra.mxu0 %v169
  %v1891 = vpop.f32.mrf.mxu0
  %v1892 = vadd.f32 0.0, %v1891
  %v1893 = vpop.f32.mrf.mxu0
  %v1894 = vpop.f32.mrf.mxu0
  %v1895 = vadd.f32 0.0, %v1894
  %v1896 = vpop.f32.mrf.mxu0
  %1897 = vdwg.mxu0
  %1902 = vrot.lane.b32.xlu0 %v1884, 32
  %v1903 = vpop.permute.xlu0 %1902
  %1904 = vrot.lane.b32.xlu0 %v1887, 32
  %v1905 = vpop.permute.xlu0 %1904
  %1906 = vrot.lane.b32.xlu0 %v1892, 32
  %v1907 = vpop.permute.xlu0 %1906
  %1908 = vrot.lane.b32.xlu0 %v1895, 32
  %v1909 = vpop.permute.xlu0 %1908
  %1914 = vst.msk [vmem:[#allocation3] sm:$0xff] %vm791, %v1903
  %1915 = vst.msk [vmem:[#allocation3 + $0x10] sm:$0xff] %vm791, %v1905
  %1916 = vst.msk [vmem:[#allocation3 + $0x20] sm:$0xff] %vm791, %v1907
  %1917 = vst.msk [vmem:[#allocation3 + $0x30] sm:$0xff] %vm791, %v1909
  %v1918 = vpack.c.bf16 %v1887, %v1884
  %v1919 = vpack.c.bf16 %v1895, %v1892
  %1920 = vmatprep.subr.bf16.mxu0 0
  %1921 = vmatpush1.bf16.msra.mxu0 0
  %1922 = vmatprep.subr.bf16.mxu0 0
  %1923 = vmatpush1.bf16.msra.mxu0 0
  %1924 = vmatprep.subr.bf16.mxu0 0
  %1925 = vmatpush1.bf16.msra.mxu0 0
  %1926 = vmatprep.subr.bf16.mxu0 0
  %1927 = vmatpush1.bf16.msra.mxu0 0
  %1928 = vmatprep.subr.bf16.mxu0 0
  %1929 = vmatpush1.bf16.msra.mxu0 0
  %1930 = vmatprep.subr.bf16.mxu0 0
  %1931 = vmatpush1.bf16.msra.mxu0 0
  %1932 = vmatprep.subr.bf16.mxu0 0
  %1933 = vmatpush1.bf16.msra.mxu0 %v1919
  %1934 = vmatprep.subr.bf16.mxu0 0
  %1935 = vmatpush1.bf16.msra.mxu0 %v1918
  %1936 = vmatprep.subr.bf16.mxu0 0
  %1937 = vmatpush2.bf16.msra.mxu0 0
  %1938 = vmatprep.subr.bf16.mxu0 0
  %1939 = vmatpush2.bf16.msra.mxu0 0
  %1940 = vmatprep.subr.bf16.mxu0 0
  %1941 = vmatpush2.bf16.msra.mxu0 0
  %1942 = vmatprep.subr.bf16.mxu0 0
  %1943 = vmatpush2.bf16.msra.mxu0 0
  %1944 = vmatprep.subr.bf16.mxu0 0
  %1945 = vmatpush2.bf16.msra.mxu0 0
  %1946 = vmatprep.subr.bf16.mxu0 0
  %1947 = vmatpush2.bf16.msra.mxu0 0
  %1948 = vmatprep.subr.bf16.mxu0 0
  %1949 = vmatpush2.bf16.msra.mxu0 0
  %1950 = vmatprep.subr.bf16.mxu0 0
  %1951 = vmatpush2.bf16.msra.mxu0 0
  %1952 = vmatprep.mubr.bf16.mxu0 0
  %1953 = vmatmul.mubr.bf16.gmra.mxu0 %v166
  %v1954 = vpop.f32.mrf.mxu0
  %v1955 = vadd.f32 0.0, %v1954
  %v1956 = vpop.f32.mrf.mxu0
  %v1957 = vpop.f32.mrf.mxu0
  %v1958 = vadd.f32 0.0, %v1957
  %v1959 = vpop.f32.mrf.mxu0
  %1960 = vmatprep.mubr.bf16.mxu0 0
  %1961 = vmatmul.mubr.bf16.gmra.mxu0 %v169
  %v1962 = vpop.f32.mrf.mxu0
  %v1963 = vadd.f32 0.0, %v1962
  %v1964 = vpop.f32.mrf.mxu0
  %v1965 = vpop.f32.mrf.mxu0
  %v1966 = vadd.f32 0.0, %v1965
  %v1967 = vpop.f32.mrf.mxu0
  %1968 = vdwg.mxu0
  %v1969 = vmul.f32 %v1955, 2.0
  %v1970 = vmul.f32 %v1958, 2.0
  %v1971 = vmul.f32 %v1963, 2.0
  %v1972 = vmul.f32 %v1966, 2.0
  %v1973 = vsub.f32 %v1969, %v1839
  %v1974 = vsub.f32 %v1970, %v1840
  %v1975 = vsub.f32 %v1971, %v1841
  %v1976 = vsub.f32 %v1972, %v1842
  %1981 = vrot.lane.b32.xlu0 %v1973, 64
  %v1982 = vpop.permute.xlu0 %1981
  %1983 = vrot.lane.b32.xlu0 %v1974, 64
  %v1984 = vpop.permute.xlu0 %1983
  %1985 = vrot.lane.b32.xlu0 %v1975, 64
  %v1986 = vpop.permute.xlu0 %1985
  %1987 = vrot.lane.b32.xlu0 %v1976, 64
  %v1988 = vpop.permute.xlu0 %1987
  %1993 = vst.msk [vmem:[#allocation3] sm:$0xff] %vm871, %v1982
  %1994 = vst.msk [vmem:[#allocation3 + $0x10] sm:$0xff] %vm871, %v1984
  %1995 = vst.msk [vmem:[#allocation3 + $0x20] sm:$0xff] %vm871, %v1986
  %1996 = vst.msk [vmem:[#allocation3 + $0x30] sm:$0xff] %vm871, %v1988
  %1997 = vmatprep.subr.bf16.mxu0 0
  %1998 = vmatpush1.bf16.msra.mxu0 0
  %1999 = vmatprep.subr.bf16.mxu0 0
  %2000 = vmatpush1.bf16.msra.mxu0 0
  %2001 = vmatprep.subr.bf16.mxu0 0
  %2002 = vmatpush1.bf16.msra.mxu0 0
  %2003 = vmatprep.subr.bf16.mxu0 0
  %2004 = vmatpush1.bf16.msra.mxu0 0
  %2005 = vmatprep.subr.bf16.mxu0 0
  %2006 = vmatpush1.bf16.msra.mxu0 0
  %2007 = vmatprep.subr.bf16.mxu0 0
  %2008 = vmatpush1.bf16.msra.mxu0 0
  %2009 = vmatprep.subr.bf16.mxu0 0
  %2010 = vmatpush1.bf16.msra.mxu0 %v1919
  %2011 = vmatprep.subr.bf16.mxu0 0
  %2012 = vmatpush1.bf16.msra.mxu0 %v1918
  %2013 = vmatprep.subr.bf16.mxu0 0
  %2014 = vmatpush2.bf16.msra.mxu0 0
  %2015 = vmatprep.subr.bf16.mxu0 0
  %2016 = vmatpush2.bf16.msra.mxu0 0
  %2017 = vmatprep.subr.bf16.mxu0 0
  %2018 = vmatpush2.bf16.msra.mxu0 0
  %2019 = vmatprep.subr.bf16.mxu0 0
  %2020 = vmatpush2.bf16.msra.mxu0 0
  %2021 = vmatprep.subr.bf16.mxu0 0
  %2022 = vmatpush2.bf16.msra.mxu0 0
  %2023 = vmatprep.subr.bf16.mxu0 0
  %2024 = vmatpush2.bf16.msra.mxu0 0
  %2025 = vmatprep.subr.bf16.mxu0 0
  %2026 = vmatpush2.bf16.msra.mxu0 0
  %2027 = vmatprep.subr.bf16.mxu0 0
  %2028 = vmatpush2.bf16.msra.mxu0 0
  %2029 = vmatprep.mubr.bf16.mxu0 0
  %2030 = vmatmul.mubr.bf16.gmra.mxu0 %v315
  %v2031 = vpop.f32.mrf.mxu0
  %v2032 = vadd.f32 0.0, %v2031
  %v2033 = vpop.f32.mrf.mxu0
  %v2034 = vpop.f32.mrf.mxu0
  %v2035 = vadd.f32 0.0, %v2034
  %v2036 = vpop.f32.mrf.mxu0
  %2037 = vmatprep.mubr.bf16.mxu0 0
  %2038 = vmatmul.mubr.bf16.gmra.mxu0 %v318
  %v2039 = vpop.f32.mrf.mxu0
  %v2040 = vadd.f32 0.0, %v2039
  %v2041 = vpop.f32.mrf.mxu0
  %v2042 = vpop.f32.mrf.mxu0
  %v2043 = vadd.f32 0.0, %v2042
  %v2044 = vpop.f32.mrf.mxu0
  %2045 = vdwg.mxu0
  %2050 = vrot.lane.b32.xlu0 %v2032, 96
  %v2051 = vpop.permute.xlu0 %2050
  %2052 = vrot.lane.b32.xlu0 %v2035, 96
  %v2053 = vpop.permute.xlu0 %2052
  %2054 = vrot.lane.b32.xlu0 %v2040, 96
  %v2055 = vpop.permute.xlu0 %2054
  %2056 = vrot.lane.b32.xlu0 %v2043, 96
  %v2057 = vpop.permute.xlu0 %2056
  %2062 = vst.msk [vmem:[#allocation3] sm:$0xff] %vm941, %v2051
  %2063 = vst.msk [vmem:[#allocation3 + $0x10] sm:$0xff] %vm941, %v2053
  %2064 = vst.msk [vmem:[#allocation3 + $0x20] sm:$0xff] %vm941, %v2055
  %2065 = vst.msk [vmem:[#allocation3 + $0x30] sm:$0xff] %vm941, %v2057
  %v2066 = vpack.c.bf16 %v2035, %v2032
  %v2067 = vpack.c.bf16 %v2043, %v2040
  %2068 = vmatprep.subr.bf16.mxu0 0
  %2069 = vmatpush1.bf16.msra.mxu0 0
  %2070 = vmatprep.subr.bf16.mxu0 0
  %2071 = vmatpush1.bf16.msra.mxu0 0
  %2072 = vmatprep.subr.bf16.mxu0 0
  %2073 = vmatpush1.bf16.msra.mxu0 0
  %2074 = vmatprep.subr.bf16.mxu0 0
  %2075 = vmatpush1.bf16.msra.mxu0 0
  %2076 = vmatprep.subr.bf16.mxu0 0
  %2077 = vmatpush1.bf16.msra.mxu0 0
  %2078 = vmatprep.subr.bf16.mxu0 0
  %2079 = vmatpush1.bf16.msra.mxu0 0
  %2080 = vmatprep.subr.bf16.mxu0 0
  %2081 = vmatpush1.bf16.msra.mxu0 %v2067
  %2082 = vmatprep.subr.bf16.mxu0 0
  %2083 = vmatpush1.bf16.msra.mxu0 %v2066
  %2084 = vmatprep.subr.bf16.mxu0 0
  %2085 = vmatpush2.bf16.msra.mxu0 0
  %2086 = vmatprep.subr.bf16.mxu0 0
  %2087 = vmatpush2.bf16.msra.mxu0 0
  %2088 = vmatprep.subr.bf16.mxu0 0
  %2089 = vmatpush2.bf16.msra.mxu0 0
  %2090 = vmatprep.subr.bf16.mxu0 0
  %2091 = vmatpush2.bf16.msra.mxu0 0
  %2092 = vmatprep.subr.bf16.mxu0 0
  %2093 = vmatpush2.bf16.msra.mxu0 0
  %2094 = vmatprep.subr.bf16.mxu0 0
  %2095 = vmatpush2.bf16.msra.mxu0 0
  %2096 = vmatprep.subr.bf16.mxu0 0
  %2097 = vmatpush2.bf16.msra.mxu0 0
  %2098 = vmatprep.subr.bf16.mxu0 0
  %2099 = vmatpush2.bf16.msra.mxu0 0
  %2100 = vmatprep.mubr.bf16.mxu0 0
  %2101 = vmatmul.mubr.bf16.gmra.mxu0 %v315
  %v2102 = vpop.f32.mrf.mxu0
  %v2103 = vadd.f32 0.0, %v2102
  %v2104 = vpop.f32.mrf.mxu0
  %v2105 = vpop.f32.mrf.mxu0
  %v2106 = vadd.f32 0.0, %v2105
  %v2107 = vpop.f32.mrf.mxu0
  %2108 = vmatprep.mubr.bf16.mxu0 0
  %2109 = vmatmul.mubr.bf16.gmra.mxu0 %v318
  %v2110 = vpop.f32.mrf.mxu0
  %v2111 = vadd.f32 0.0, %v2110
  %v2112 = vpop.f32.mrf.mxu0
  %v2113 = vpop.f32.mrf.mxu0
  %v2114 = vadd.f32 0.0, %v2113
  %v2115 = vpop.f32.mrf.mxu0
  %2116 = vdwg.mxu0
  %v2117 = vmul.f32 %v2103, 2.0
  %v2118 = vmul.f32 %v2106, 2.0
  %v2119 = vmul.f32 %v2111, 2.0
  %v2120 = vmul.f32 %v2114, 2.0
  %v2121 = vsub.f32 %v2117, %v1884
  %v2122 = vsub.f32 %v2118, %v1887
  %v2123 = vsub.f32 %v2119, %v1892
  %v2124 = vsub.f32 %v2120, %v1895
  %2125 = vst.msk [vmem:[#allocation3 + $0x8] sm:$0xff] %vm143, %v2121
  %2126 = vst.msk [vmem:[#allocation3 + $0x18] sm:$0xff] %vm143, %v2122
  %2127 = vst.msk [vmem:[#allocation3 + $0x28] sm:$0xff] %vm143, %v2123
  %2128 = vst.msk [vmem:[#allocation3 + $0x38] sm:$0xff] %vm143, %v2124
  %v2129 = vld [vmem:[#allocation3] sm:$0xff]
  %v2130 = vld [vmem:[#allocation3 + $0x8] sm:$0xff]
  %v2131 = vld [vmem:[#allocation3 + $0x10] sm:$0xff]
  %v2132 = vld [vmem:[#allocation3 + $0x18] sm:$0xff]
  %v2133 = vld [vmem:[#allocation3 + $0x20] sm:$0xff]
  %v2134 = vld [vmem:[#allocation3 + $0x28] sm:$0xff]
  %v2135 = vld [vmem:[#allocation3 + $0x30] sm:$0xff]
  %v2136 = vld [vmem:[#allocation3 + $0x38] sm:$0xff]
  %v2137 = vpack.c.bf16 %v2131, %v2129
  %v2138 = vpack.c.bf16 %v2132, %v2130
  %v2139 = vpack.c.bf16 %v2135, %v2133
  %v2140 = vpack.c.bf16 %v2136, %v2134
  %v2161 = vunpack.c.l.b16 %v1259
  %v2162 = vunpack.c.l.b16 %v1260
  %v2163 = vunpack.c.l.b16 %v1261
  %v2164 = vunpack.c.l.b16 %v1262
  %v2165 = vunpack.c.l.b16 %v1263
  %v2166 = vunpack.c.l.b16 %v1264
  %v2167 = vunpack.c.l.b16 %v1265
  %v2168 = vunpack.c.l.b16 %v1266
  %v2169 = vunpack.c.l.b16 %v1267
  %v2170 = vunpack.c.l.b16 %v1268
  %v2171 = vunpack.c.l.b16 %v1269
  %v2172 = vunpack.c.l.b16 %v1270
  %v2173 = vunpack.c.l.b16 %v1271
  %v2174 = vunpack.c.l.b16 %v1272
  %v2175 = vunpack.c.l.b16 %v1273
  %v2176 = vunpack.c.l.b16 %v1274
  %v2177 = vunpack.c.l.b16 %v1275
  %v2178 = vunpack.c.l.b16 %v1276
  %v2179 = vunpack.c.l.b16 %v1277
  %v2180 = vunpack.c.l.b16 %v1278
  %v2181 = vpack.c.b16 %v2162, %v2161
  %v2182 = vpack.c.b16 %v2164, %v2163
  %v2183 = vpack.c.b16 %v2166, %v2165
  %v2184 = vpack.c.b16 %v2168, %v2167
  %v2185 = vpack.c.b16 %v2170, %v2169
  %v2186 = vpack.c.b16 %v2172, %v2171
  %v2187 = vpack.c.b16 %v2174, %v2173
  %v2188 = vpack.c.b16 %v2176, %v2175
  %v2189 = vpack.c.b16 %v2178, %v2177
  %v2190 = vpack.c.b16 %v2180, %v2179
  %2205 = vrot.lane.b32.xlu0 %v1809, 64
  %v2206 = vpop.permute.xlu0 %2205
  %2207 = vrot.lane.b32.xlu0 %v1812, 64
  %v2208 = vpop.permute.xlu0 %2207
  %2209 = vrot.lane.b32.xlu0 %v1817, 64
  %v2210 = vpop.permute.xlu0 %2209
  %2211 = vrot.lane.b32.xlu0 %v1820, 64
  %v2212 = vpop.permute.xlu0 %2211
  %v2218 = vsel %vm143, %v2138, 0
  %v2221 = vsel %vm143, %v2140, 0
  %2223 = vmatprep.subr.bf16.mxu0 0
  %2224 = vmatpush1.bf16.msra.mxu0 %v2188
  %2225 = vmatprep.subr.bf16.mxu0 0
  %2226 = vmatpush1.bf16.msra.mxu0 %v2187
  %2227 = vmatprep.subr.bf16.mxu0 0
  %2228 = vmatpush1.bf16.msra.mxu0 %v2186
  %2229 = vmatprep.subr.bf16.mxu0 0
  %2230 = vmatpush1.bf16.msra.mxu0 %v2185
  %2231 = vmatprep.subr.bf16.mxu0 0
  %2232 = vmatpush1.bf16.msra.mxu0 %v2184
  %2233 = vmatprep.subr.bf16.mxu0 0
  %2234 = vmatpush1.bf16.msra.mxu0 %v2183
  %2235 = vmatprep.subr.bf16.mxu0 0
  %2236 = vmatpush1.bf16.msra.mxu0 %v2182
  %2237 = vmatprep.subr.bf16.mxu0 0
  %2238 = vmatpush1.bf16.msra.mxu0 %v2181
  %2239 = vmatprep.subr.bf16.mxu0 0
  %2240 = vmatpush2.bf16.msra.mxu0 0
  %2241 = vmatprep.subr.bf16.mxu0 0
  %2242 = vmatpush2.bf16.msra.mxu0 0
  %2243 = vmatprep.subr.bf16.mxu0 0
  %2244 = vmatpush2.bf16.msra.mxu0 0
  %2245 = vmatprep.subr.bf16.mxu0 0
  %2246 = vmatpush2.bf16.msra.mxu0 0
  %2247 = vmatprep.subr.bf16.mxu0 0
  %2248 = vmatpush2.bf16.msra.mxu0 0
  %2249 = vmatprep.subr.bf16.mxu0 0
  %2250 = vmatpush2.bf16.msra.mxu0 0
  %2251 = vmatprep.subr.bf16.mxu0 0
  %2252 = vmatpush2.bf16.msra.mxu0 %v2190
  %2253 = vmatprep.subr.bf16.mxu0 0
  %2254 = vmatpush2.bf16.msra.mxu0 %v2189
  %2255 = vmatprep.mubr.bf16.mxu0 %v2218
  %2256 = vmatmul.mubr.bf16.gmra.mxu0 %v2137
  %v2257 = vpop.f32.mrf.mxu0
  %v2258 = vadd.f32 %v2206, %v2257
  %v2259 = vpop.f32.mrf.mxu0
  %v2260 = vpop.f32.mrf.mxu0
  %v2261 = vadd.f32 %v2208, %v2260
  %v2262 = vpop.f32.mrf.mxu0
  %2263 = vmatprep.mubr.bf16.mxu0 %v2221
  %2264 = vmatmul.mubr.bf16.gmra.mxu0 %v2139
  %v2265 = vpop.f32.mrf.mxu0
  %v2266 = vadd.f32 %v2210, %v2265
  %v2267 = vpop.f32.mrf.mxu0
  %v2268 = vpop.f32.mrf.mxu0
  %v2269 = vadd.f32 %v2212, %v2268
  %v2270 = vpop.f32.mrf.mxu0
  %2271 = vdwg.mxu0
  %v2273 = vlaneseq
  %v2274 = vshrl.u32 %v2273, 7
  %v2275 = vsub.s32 0, %v2274
  %v2276 = vrot.slane %v1279, %v2275
  %v2278 = vadd.f32 %v2258, %v2276
  %v2279 = vadd.f32 %v2261, %v2276
  %v2280 = vadd.f32 %v2266, %v2276
  %v2281 = vadd.f32 %v2269, %v2276
  %v2282 = vtanh.pop %v2278
  %v2283 = vtanh.pop %v2279
  %v2284 = vtanh.pop %v2280
  %v2285 = vtanh.pop %v2281
  %v2286 = vmul.f32 %v1835, %v1290
  %v2287 = vmul.f32 %v1836, %v1292
  %v2288 = vmul.f32 %v1837, %v1294
  %v2289 = vmul.f32 %v1838, %v1296
  %v2290 = vsub.f32 1.0, %v1835
  %v2291 = vsub.f32 1.0, %v1836
  %v2292 = vsub.f32 1.0, %v1837
  %v2293 = vsub.f32 1.0, %v1838
  %2298 = vrot.lane.b32.xlu0 %v2282, 32
  %v2299 = vpop.permute.xlu0 %2298
  %2300 = vrot.lane.b32.xlu0 %v2283, 32
  %v2301 = vpop.permute.xlu0 %2300
  %2302 = vrot.lane.b32.xlu0 %v2284, 32
  %v2303 = vpop.permute.xlu0 %2302
  %2304 = vrot.lane.b32.xlu0 %v2285, 32
  %v2305 = vpop.permute.xlu0 %2304
  %v2310 = vmul.f32 %v2290, %v2299
  %v2311 = vmul.f32 %v2291, %v2301
  %v2312 = vmul.f32 %v2292, %v2303
  %v2313 = vmul.f32 %v2293, %v2305
  %v2314 = vadd.f32 %v2286, %v2310
  %v2315 = vadd.f32 %v2287, %v2311
  %v2316 = vadd.f32 %v2288, %v2312
  %v2317 = vadd.f32 %v2289, %v2313
  %2322 = vrot.lane.b32.xlu0 %v2314, 96
  %v2323 = vpop.permute.xlu0 %2322
  %2324 = vrot.lane.b32.xlu0 %v2315, 96
  %v2325 = vpop.permute.xlu0 %2324
  %2326 = vrot.lane.b32.xlu0 %v2316, 96
  %v2327 = vpop.permute.xlu0 %2326
  %2328 = vrot.lane.b32.xlu0 %v2317, 96
  %v2329 = vpop.permute.xlu0 %2328
  %s2334 = scalar_lea.vmem %s14, 32
  %2335 = vst.msk [vmem:[%s2334] sm:$0xff] %vm143, %v2323
  %2336 = vst.msk [vmem:[%s2334 + $0x8] sm:$0xff] %vm143, %v2325
  %2337 = vst.msk [vmem:[%s2334 + $0x10] sm:$0xff] %vm143, %v2327
  %2338 = vst.msk [vmem:[%s2334 + $0x18] sm:$0xff] %vm143, %v2329
  %v2339 = vld [vmem:[%s11] sm:$0x1]
  %v2340 = vld [vmem:[#allocation4] sm:$0x1]
  %2342 = vset.pattern.permute.xlu0 0
  %2343 = vperm.xlu0 %2342, %v2340
  %v2344 = vpop.permute.xlu0 %2343
  %v2346 = vlaneseq
  %v2347 = vshrl.u32 %v2346, 7
  %v2348 = vsub.s32 0, %v2347
  %v2349 = vrot.slane %v2344, %v2348
  %v2351 = vsel %vm143, %v2339, 0
  %v2353 = vsel %vm143, %v2323, 0
  %v2355 = vsel %vm143, %v2325, 0
  %v2357 = vsel %vm143, %v2327, 0
  %v2359 = vsel %vm143, %v2329, 0
  %2361 = vmatprep.subr.mxu0 0.0
  %2362 = vmatpush1.xpose.msra.mxu0 0.0
  %2363 = vmatprep.subr.mxu0 0.0
  %2364 = vmatpush1.xpose.msra.mxu0 0.0
  %2365 = vmatprep.subr.mxu0 0.0
  %2366 = vmatpush1.xpose.msra.mxu0 0.0
  %2367 = vmatprep.subr.mxu0 0.0
  %2368 = vmatpush1.xpose.msra.mxu0 0.0
  %2369 = vmatprep.subr.mxu0 0.0
  %2370 = vmatpush1.xpose.msra.mxu0 0.0
  %2371 = vmatprep.subr.mxu0 0.0
  %2372 = vmatpush1.xpose.msra.mxu0 0.0
  %2373 = vmatprep.subr.mxu0 0.0
  %2374 = vmatpush1.xpose.msra.mxu0 0.0
  %2375 = vmatprep.subr.mxu0 0.0
  %2376 = vmatpush1.xpose.msra.mxu0 0.0
  %2377 = vmatprep.subr.mxu0 0.0
  %2378 = vmatpush1.xpose.msra.mxu0 0.0
  %2379 = vmatprep.subr.mxu0 0.0
  %2380 = vmatpush1.xpose.msra.mxu0 0.0
  %2381 = vmatprep.subr.mxu0 0.0
  %2382 = vmatpush1.xpose.msra.mxu0 0.0
  %2383 = vmatprep.subr.mxu0 0.0
  %2384 = vmatpush1.xpose.msra.mxu0 0.0
  %2385 = vmatprep.subr.mxu0 0.0
  %2386 = vmatpush1.xpose.msra.mxu0 %v2359
  %2387 = vmatprep.subr.mxu0 0.0
  %2388 = vmatpush1.xpose.msra.mxu0 %v2357
  %2389 = vmatprep.subr.mxu0 0.0
  %2390 = vmatpush1.xpose.msra.mxu0 %v2355
  %2391 = vmatprep.subr.mxu0 0.0
  %2392 = vmatpush1.xpose.msra.mxu0 %v2353
  %2393 = vmatprep.subr.mxu0 0.0
  %2394 = vmatpush2.xpose.msra.mxu0 0.0
  %2395 = vmatprep.subr.mxu0 0.0
  %2396 = vmatpush2.xpose.msra.mxu0 0.0
  %2397 = vmatprep.subr.mxu0 0.0
  %2398 = vmatpush2.xpose.msra.mxu0 0.0
  %2399 = vmatprep.subr.mxu0 0.0
  %2400 = vmatpush2.xpose.msra.mxu0 0.0
  %2401 = vmatprep.subr.mxu0 0.0
  %2402 = vmatpush2.xpose.msra.mxu0 0.0
  %2403 = vmatprep.subr.mxu0 0.0
  %2404 = vmatpush2.xpose.msra.mxu0 0.0
  %2405 = vmatprep.subr.mxu0 0.0
  %2406 = vmatpush2.xpose.msra.mxu0 0.0
  %2407 = vmatprep.subr.mxu0 0.0
  %2408 = vmatpush2.xpose.msra.mxu0 0.0
  %2409 = vmatprep.subr.mxu0 0.0
  %2410 = vmatpush2.xpose.msra.mxu0 0.0
  %2411 = vmatprep.subr.mxu0 0.0
  %2412 = vmatpush2.xpose.msra.mxu0 0.0
  %2413 = vmatprep.subr.mxu0 0.0
  %2414 = vmatpush2.xpose.msra.mxu0 0.0
  %2415 = vmatprep.subr.mxu0 0.0
  %2416 = vmatpush2.xpose.msra.mxu0 0.0
  %2417 = vmatprep.subr.mxu0 0.0
  %2418 = vmatpush2.xpose.msra.mxu0 0.0
  %2419 = vmatprep.subr.mxu0 0.0
  %2420 = vmatpush2.xpose.msra.mxu0 0.0
  %2421 = vmatprep.subr.mxu0 0.0
  %2422 = vmatpush2.xpose.msra.mxu0 0.0
  %2423 = vmatprep.subr.mxu0 0.0
  %2424 = vmatpush2.xpose.msra.mxu0 0.0
  %2425 = vmatprep.mubr.f32.mxu0 0.0
  %2426 = vmatmul.mubr.f32.gmra.mxu0 %v2351
  %v2427 = vpop.f32.mrf.mxu0
  %v2428 = vadd.f32 %v2349, %v2427
  %v2429 = vpop.f32.mrf.mxu0
  %2430 = vdwg.mxu0
  %vm2431 = vcmask 253952
  %2432 = vst.msk [vmem:[%s13] sm:$0x1] %vm2431, %v2428
  // Predicated region
  $region54: #{decoder_forward.1} parent=0 // pred_check
    _
  $region55: #{decoder_forward.1} parent=0 // pred_check_branch
    %2434 = sbr.rel (0) target = $region57
  $region56: #{decoder_forward.1} parent=0 // pred_region
    _
  $region57: #{decoder_forward.1} parent=0 // pred_fallthru
    _
  // Predicated region
  $region58: #{decoder_forward.1} parent=0 // pred_check
    _
  $region59: #{decoder_forward.1} parent=0 // pred_check_branch
    %2436 = sbr.rel (0) target = $region61
  $region60: #{decoder_forward.1} parent=0 // pred_region
    _
  $region61: #{decoder_forward.1} parent=0 // pred_fallthru
    _
  // Predicated region
  $region62: #{decoder_forward.1} parent=0 // pred_check
    _
  $region63: #{decoder_forward.1} parent=0 // pred_check_branch
    %2438 = sbr.rel (0) target = $region65
  $region64: #{decoder_forward.1} parent=0 // pred_region
    _
  $region65: #{decoder_forward.1} parent=0 // pred_fallthru
    _
  // Predicated region
  $region66: #{decoder_forward.1} parent=0 // pred_check
    _
  $region67: #{decoder_forward.1} parent=0 // pred_check_branch
    %2440 = sbr.rel (0) target = $region69
  $region68: #{decoder_forward.1} parent=0 // pred_region
    _
  $region69: #{decoder_forward.1} parent=0 // pred_fallthru
    _

</llo_original>
